<compile_context>
chip_gen: v5e
topology: v5e:2x2
jax: 0.10.0
libtpu: 0.0.40
codegen_flags: <defaults>
</compile_context>

<pallas_src>
import jax
import jax.numpy as jnp
from jax import lax
from jax.experimental import pallas as pl
from jax.experimental.pallas import tpu as pltpu


def lstm_kernel(xg_ref, whh_ref, o_ref, h_sc, c_sc):
    """One grid step == one chunk of Tc LSTM time steps.

    xg_ref : (Tc, B, 4Hp) bf16  precomputed x @ W_ih^T + bias for this chunk
    whh_ref: (Hp, 4Hp)    bf16  W_hh^T, zero-padded to 128-lane gate slots
    o_ref  : (Tc, B, Hp)  bf16  hidden-state outputs for this chunk
    h_sc/c_sc : (B, Hp) f32 VMEM scratch carrying (h, c) across grid steps.
    """
    @pl.when(pl.program_id(0) == 0)
    def _():
        h_sc[...] = jnp.zeros_like(h_sc)
        c_sc[...] = jnp.zeros_like(c_sc)

    hp = h_sc.shape[-1]
    tc = xg_ref.shape[0]          # static (block shape)

    def sigmoid(v):
        # tanh identity: keeps the transcendental on the EUP slot.
        return 0.5 * jnp.tanh(0.5 * v) + 0.5

    def step(t, carry):
        xg = xg_ref[t].astype(jnp.float32)             # (B, 4Hp) bf16 -> f32
        h_bf = h_sc[...].astype(jnp.bfloat16)          # bf16 MXU operand

        def rdot(gate):                                # per-gate (Hp,Hp) dot
            w = whh_ref[:, gate * hp:(gate + 1) * hp]  # 128-lane aligned
            return jnp.dot(h_bf, w, preferred_element_type=jnp.float32)

        # Gate order i, f, g, o (PyTorch). Gate math stays f32 on the VPU/EUP
        # and overlaps with the remaining MXU result drains.
        i = sigmoid(xg[:, 0 * hp:1 * hp] + rdot(0))
        f = sigmoid(xg[:, 1 * hp:2 * hp] + rdot(1))
        g = jnp.tanh(xg[:, 2 * hp:3 * hp] + rdot(2))
        c_new = f * c_sc[...] + i * g
        o = sigmoid(xg[:, 3 * hp:4 * hp] + rdot(3))
        h_new = o * jnp.tanh(c_new)
        c_sc[...] = c_new
        h_sc[...] = h_new
        o_ref[t] = h_new.astype(o_ref.dtype)           # lane-dense (B, 128) store
        return carry

    # Capped partial unroll (avoids code bloat / vreg pressure at large tc).
    unroll = 8 if tc % 8 == 0 else (4 if tc % 4 == 0 else (2 if tc % 2 == 0 else 1))
    lax.fori_loop(0, tc, step, 0, unroll=unroll)


def client_lstm_forward(x, w_ih, w_hh, b_ih, b_hh, *, time_chunk=None):
    """Forward pass of ClientLSTM (eval-mode dropout == identity).

    x    : (B, T, D)  batch_first, same as PyTorch
    w_ih : (4H, D), w_hh: (4H, H), b_ih/b_hh: (4H,)
    returns (B, T, H)
    """
    B, T, D = x.shape
    H = w_hh.shape[1]
    Hp = max(128, ((H + 127) // 128) * 128)            # lane-aligned hidden size
    G = 4 * Hp

    # ---- pad each gate's rows/cols into its own 128-lane-aligned slot ------
    def pad_gate_rows(w):                              # (4H, K) -> (4Hp, K)
        w4 = w.reshape(4, H, w.shape[-1])
        return jnp.pad(w4, ((0, 0), (0, Hp - H), (0, 0))).reshape(4 * Hp,
                                                                  w.shape[-1])

    wih_p = pad_gate_rows(w_ih)                                   # (4Hp, D)
    whh_p = jnp.pad(pad_gate_rows(w_hh), ((0, 0), (0, Hp - H)))   # (4Hp, Hp)
    bias_p = jnp.pad((b_ih + b_hh).reshape(4, H),
                     ((0, 0), (0, Hp - H))).reshape(G)            # (4Hp,)

    # ---- hoist the input projection out of the recurrence -------------------
    # Transpose the NARROW (D-wide) input first, so the 512-wide gate tensor
    # is produced directly in (T, B, 4Hp) — no wide XLA transpose.
    x_tbd = jnp.transpose(x, (1, 0, 2)).astype(jnp.bfloat16)      # (T, B, D)
    wih_t = wih_p.T.astype(jnp.bfloat16)                           # (D, 4Hp)
    xg = jnp.einsum("tbd,dg->tbg", x_tbd, wih_t,
                    preferred_element_type=jnp.float32) + bias_p   # (T, B, G) f32
    xg = xg.astype(jnp.bfloat16)                                   # bf16 in HBM

    # ---- choose time chunk under a conservative VMEM budget -----------------
    tc = time_chunk if time_chunk is not None else 32
    tc = max(1, min(tc, T))

    def vmem_bytes(tc_):
        return (2 * tc_ * B * G * 2       # xg block, bf16, double-buffered
                + 2 * tc_ * B * Hp * 2    # out block, bf16, double-buffered
                + 2 * Hp * G * 2          # whh, bf16 (constant, 2 buffers)
                + 2 * B * Hp * 4)         # h, c scratch (f32)
    while tc > 8 and vmem_bytes(tc) > 24 * 1024 * 1024:   # < v7x 32 MiB scoped
        tc //= 2

    T_pad = ((T + tc - 1) // tc) * tc
    if T_pad != T:
        # Padded (trailing) timesteps run harmlessly after all valid ones.
        xg = jnp.pad(xg, ((0, T_pad - T), (0, 0), (0, 0)))

    whh_t = whh_p.T.astype(jnp.bfloat16)                           # (Hp, 4Hp)

    out_tbh = pl.pallas_call(
        lstm_kernel,
        out_shape=jax.ShapeDtypeStruct((T_pad, B, Hp), jnp.bfloat16),
        grid_spec=pltpu.PrefetchScalarGridSpec(
            num_scalar_prefetch=0,
            grid=(T_pad // tc,),
            in_specs=[
                pl.BlockSpec((tc, B, G), lambda t: (t, 0, 0)),
                pl.BlockSpec((Hp, G), lambda t: (0, 0)),
            ],
            out_specs=pl.BlockSpec((tc, B, Hp), lambda t: (t, 0, 0)),
            scratch_shapes=[
                pltpu.VMEM((B, Hp), jnp.float32),   # h carry
                pltpu.VMEM((B, Hp), jnp.float32),   # c carry
            ],
        ),
        compiler_params=pltpu.CompilerParams(
            dimension_semantics=("arbitrary",)      # time is a sequential carry
        ),
    )(xg, whh_t)

    # (T_pad, B, Hp) -> (B, T, H); transpose + slice fuse into one XLA copy.
    y = jnp.transpose(out_tbh[:T], (1, 0, 2))[:, :, :H]
    # Dropout(0.5) in eval mode == identity.
    return y.astype(x.dtype)


def lstm_reference(x, w_ih, w_hh, b_ih, b_hh):
    """Pure-JAX f32 reference (mirrors torch.nn.LSTM, batch_first=True)."""
    B, T, D = x.shape
    H = w_hh.shape[1]
    bias = b_ih + b_hh

    def step(carry, x_t):
        h, c = carry
        gates = x_t @ w_ih.T + h @ w_hh.T + bias
        i = jax.nn.sigmoid(gates[:, 0 * H:1 * H])
        f = jax.nn.sigmoid(gates[:, 1 * H:2 * H])
        g = jnp.tanh(gates[:, 2 * H:3 * H])
        o = jax.nn.sigmoid(gates[:, 3 * H:4 * H])
        c = f * c + i * g
        h = o * jnp.tanh(c)
        return (h, c), h

    h0 = jnp.zeros((B, H), x.dtype)
    c0 = jnp.zeros((B, H), x.dtype)
    _, hs = lax.scan(step, (h0, c0), jnp.transpose(x, (1, 0, 2)))
    return jnp.transpose(hs, (1, 0, 2))


if __name__ == "__main__":
    # input_shape ~ (seq_len, n_features); nn.LSTM(input_shape[1], 100)
    B, T, D, H = 2, 8, 16, 100

    key = jax.random.PRNGKey(0)
    kx, kw1, kw2, kb1, kb2 = jax.random.split(key, 5)

    # Deterministic param init mimicking PyTorch's U(-1/sqrt(H), 1/sqrt(H)).
    bound = 1.0 / jnp.sqrt(jnp.float32(H))
    x = jax.random.normal(kx, (B, T, D), jnp.float32)
    w_ih = jax.random.uniform(kw1, (4 * H, D), jnp.float32, -bound, bound)
    w_hh = jax.random.uniform(kw2, (4 * H, H), jnp.float32, -bound, bound)
    b_ih = jax.random.uniform(kb1, (4 * H,), jnp.float32, -bound, bound)
    b_hh = jax.random.uniform(kb2, (4 * H,), jnp.float32, -bound, bound)

    # time_chunk=4 -> grid=(2,) so the cross-grid-step (h, c) carry is exercised.
    fwd = jax.jit(client_lstm_forward, static_argnames=("time_chunk",))
    y = jax.block_until_ready(fwd(x, w_ih, w_hh, b_ih, b_hh, time_chunk=4))
    y_ref = jax.block_until_ready(lstm_reference(x, w_ih, w_hh, b_ih, b_hh))

    assert y.shape == (B, T, H), y.shape
    # bf16 MXU operands + bf16 xg/output storage: loosened, T-dependent tolerance
    # (f32 accumulate + f32 gate math keep the drift small; expected ~5e-3).
    err = float(jnp.max(jnp.abs(y - y_ref)))
    assert jnp.allclose(y, y_ref, atol=3e-2, rtol=3e-2), err
    print("KERNEL_OK")
</pallas_src>

<mosaic_0001>
module attributes {stable_mosaic.version = 11 : i64} {
  func.func @lstm_kernel(%arg0: i32, %arg1: memref<4x2x512xbf16, #tpu.memory_space<vmem>>, %arg2: memref<128x512xbf16, #tpu.memory_space<vmem>>, %arg3: memref<4x2x128xbf16, #tpu.memory_space<vmem>>, %arg4: memref<2x128xf32, #tpu.memory_space<vmem>>, %arg5: memref<2x128xf32, #tpu.memory_space<vmem>>) attributes {dimension_semantics = [#tpu.dimension_semantics<arbitrary>], iteration_bounds = array<i64: 2>, scalar_prefetch = 0 : i64, scratch_operands = 2 : i64, tpu.core_type = #tpu.core_type<tc>, window_params = [{transform_indices = @transform_0, window_bounds = array<i64: 4, 2, 512>}, {pipeline_mode = #tpu.pipeline_mode<synchronous>, transform_indices = @transform_1, window_bounds = array<i64: 128, 512>}, {transform_indices = @transform_2, window_bounds = array<i64: 4, 2, 128>}]} {
    %c0_i32 = arith.constant 0 : i32
    %0 = arith.cmpi eq, %arg0, %c0_i32 : i32
    %1 = arith.extui %0 : i1 to i32
    %c0_i32_0 = arith.constant 0 : i32
    %2 = arith.cmpi ne, %1, %c0_i32_0 : i32
    scf.if %2 {
      %cst_129 = arith.constant 0.000000e+00 : f32
      %231 = vector.broadcast %cst_129 : f32 to vector<2x128xf32>
      %c0_130 = arith.constant 0 : index
      %c0_131 = arith.constant 0 : index
      %232 = vector.load %arg4[%c0_130, %c0_131] : memref<2x128xf32, #tpu.memory_space<vmem>>, vector<2x128xf32>
      tpu.vector_store %arg4[%c0_130, %c0_131], %231 {strides = array<i32>} : memref<2x128xf32, #tpu.memory_space<vmem>>, vector<2x128xf32>,
      %cst_132 = arith.constant 0.000000e+00 : f32
      %233 = vector.broadcast %cst_132 : f32 to vector<2x128xf32>
      %c0_133 = arith.constant 0 : index
      %c0_134 = arith.constant 0 : index
      %234 = vector.load %arg5[%c0_133, %c0_134] : memref<2x128xf32, #tpu.memory_space<vmem>>, vector<2x128xf32>
      tpu.vector_store %arg5[%c0_133, %c0_134], %233 {strides = array<i32>} : memref<2x128xf32, #tpu.memory_space<vmem>>, vector<2x128xf32>,
    } else {
    }
    %c0_i32_1 = arith.constant 0 : i32
    %3 = arith.index_cast %c0_i32_1 : i32 to index
    %c0 = arith.constant 0 : index
    %c0_2 = arith.constant 0 : index
    %4 = vector.load %arg1[%3, %c0, %c0_2] : memref<4x2x512xbf16, #tpu.memory_space<vmem>>, vector<1x2x512xbf16>
    %5 = vector.shape_cast %4 : vector<1x2x512xbf16> to vector<2x512xbf16>
    %6 = arith.extf %5 : vector<2x512xbf16> to vector<2x512xf32>
    %c0_3 = arith.constant 0 : index
    %c0_4 = arith.constant 0 : index
    %7 = vector.load %arg4[%c0_3, %c0_4] : memref<2x128xf32, #tpu.memory_space<vmem>>, vector<2x128xf32>
    %8 = arith.truncf %7 : vector<2x128xf32> to vector<2x128xbf16>
    %9 = vector.extract_strided_slice %6 {offsets = [0, 0], sizes = [2, 128], strides = [1, 1]} : vector<2x512xf32> to vector<2x128xf32>
    %c0_5 = arith.constant 0 : index
    %c0_6 = arith.constant 0 : index
    %10 = vector.load %arg2[%c0_5, %c0_6] : memref<128x512xbf16, #tpu.memory_space<vmem>>, vector<128x128xbf16>
    %cst = arith.constant dense<0.000000e+00> : vector<2x128xf32>
    %11 = tpu.matmul %8, %10, %cst {dimension_numbers = #tpu.dot_dimension_numbers<[1], [0], [0], [1], [0, 0, 1, 1], [], []>} : vector<2x128xbf16>, vector<128x128xbf16>, vector<2x128xf32> -> vector<2x128xf32>
    %12 = arith.addf %9, %11 : vector<2x128xf32>
    %cst_7 = arith.constant 5.000000e-01 : f32
    %13 = vector.broadcast %cst_7 : f32 to vector<2x128xf32>
    %14 = arith.mulf %13, %12 : vector<2x128xf32>
    %15 = math.tanh %14 : vector<2x128xf32>
    %cst_8 = arith.constant 5.000000e-01 : f32
    %16 = vector.broadcast %cst_8 : f32 to vector<2x128xf32>
    %17 = arith.mulf %16, %15 : vector<2x128xf32>
    %cst_9 = arith.constant 5.000000e-01 : f32
    %18 = vector.broadcast %cst_9 : f32 to vector<2x128xf32>
    %19 = arith.addf %17, %18 : vector<2x128xf32>
    %20 = vector.extract_strided_slice %6 {offsets = [0, 128], sizes = [2, 128], strides = [1, 1]} : vector<2x512xf32> to vector<2x128xf32>
    %c0_10 = arith.constant 0 : index
    %c128 = arith.constant 128 : index
    %21 = vector.load %arg2[%c0_10, %c128] : memref<128x512xbf16, #tpu.memory_space<vmem>>, vector<128x128xbf16>
    %cst_11 = arith.constant dense<0.000000e+00> : vector<2x128xf32>
    %22 = tpu.matmul %8, %21, %cst_11 {dimension_numbers = #tpu.dot_dimension_numbers<[1], [0], [0], [1], [0, 0, 1, 1], [], []>} : vector<2x128xbf16>, vector<128x128xbf16>, vector<2x128xf32> -> vector<2x128xf32>
    %23 = arith.addf %20, %22 : vector<2x128xf32>
    %cst_12 = arith.constant 5.000000e-01 : f32
    %24 = vector.broadcast %cst_12 : f32 to vector<2x128xf32>
    %25 = arith.mulf %24, %23 : vector<2x128xf32>
    %26 = math.tanh %25 : vector<2x128xf32>
    %cst_13 = arith.constant 5.000000e-01 : f32
    %27 = vector.broadcast %cst_13 : f32 to vector<2x128xf32>
    %28 = arith.mulf %27, %26 : vector<2x128xf32>
    %cst_14 = arith.constant 5.000000e-01 : f32
    %29 = vector.broadcast %cst_14 : f32 to vector<2x128xf32>
    %30 = arith.addf %28, %29 : vector<2x128xf32>
    %31 = vector.extract_strided_slice %6 {offsets = [0, 256], sizes = [2, 128], strides = [1, 1]} : vector<2x512xf32> to vector<2x128xf32>
    %c0_15 = arith.constant 0 : index
    %c256 = arith.constant 256 : index
    %32 = vector.load %arg2[%c0_15, %c256] : memref<128x512xbf16, #tpu.memory_space<vmem>>, vector<128x128xbf16>
    %cst_16 = arith.constant dense<0.000000e+00> : vector<2x128xf32>
    %33 = tpu.matmul %8, %32, %cst_16 {dimension_numbers = #tpu.dot_dimension_numbers<[1], [0], [0], [1], [0, 0, 1, 1], [], []>} : vector<2x128xbf16>, vector<128x128xbf16>, vector<2x128xf32> -> vector<2x128xf32>
    %34 = arith.addf %31, %33 : vector<2x128xf32>
    %35 = math.tanh %34 : vector<2x128xf32>
    %c0_17 = arith.constant 0 : index
    %c0_18 = arith.constant 0 : index
    %36 = vector.load %arg5[%c0_17, %c0_18] : memref<2x128xf32, #tpu.memory_space<vmem>>, vector<2x128xf32>
    %37 = arith.mulf %30, %36 : vector<2x128xf32>
    %38 = arith.mulf %19, %35 : vector<2x128xf32>
    %39 = arith.addf %37, %38 : vector<2x128xf32>
    %40 = vector.extract_strided_slice %6 {offsets = [0, 384], sizes = [2, 128], strides = [1, 1]} : vector<2x512xf32> to vector<2x128xf32>
    %c0_19 = arith.constant 0 : index
    %c384 = arith.constant 384 : index
    %41 = vector.load %arg2[%c0_19, %c384] : memref<128x512xbf16, #tpu.memory_space<vmem>>, vector<128x128xbf16>
    %cst_20 = arith.constant dense<0.000000e+00> : vector<2x128xf32>
    %42 = tpu.matmul %8, %41, %cst_20 {dimension_numbers = #tpu.dot_dimension_numbers<[1], [0], [0], [1], [0, 0, 1, 1], [], []>} : vector<2x128xbf16>, vector<128x128xbf16>, vector<2x128xf32> -> vector<2x128xf32>
    %43 = arith.addf %40, %42 : vector<2x128xf32>
    %cst_21 = arith.constant 5.000000e-01 : f32
    %44 = vector.broadcast %cst_21 : f32 to vector<2x128xf32>
    %45 = arith.mulf %44, %43 : vector<2x128xf32>
    %46 = math.tanh %45 : vector<2x128xf32>
    %cst_22 = arith.constant 5.000000e-01 : f32
    %47 = vector.broadcast %cst_22 : f32 to vector<2x128xf32>
    %48 = arith.mulf %47, %46 : vector<2x128xf32>
    %cst_23 = arith.constant 5.000000e-01 : f32
    %49 = vector.broadcast %cst_23 : f32 to vector<2x128xf32>
    %50 = arith.addf %48, %49 : vector<2x128xf32>
    %51 = math.tanh %39 : vector<2x128xf32>
    %52 = arith.mulf %50, %51 : vector<2x128xf32>
    %c0_24 = arith.constant 0 : index
    %c0_25 = arith.constant 0 : index
    %53 = vector.load %arg5[%c0_24, %c0_25] : memref<2x128xf32, #tpu.memory_space<vmem>>, vector<2x128xf32>
    tpu.vector_store %arg5[%c0_24, %c0_25], %39 {strides = array<i32>} : memref<2x128xf32, #tpu.memory_space<vmem>>, vector<2x128xf32>,
    %c0_26 = arith.constant 0 : index
    %c0_27 = arith.constant 0 : index
    %54 = vector.load %arg4[%c0_26, %c0_27] : memref<2x128xf32, #tpu.memory_space<vmem>>, vector<2x128xf32>
    tpu.vector_store %arg4[%c0_26, %c0_27], %52 {strides = array<i32>} : memref<2x128xf32, #tpu.memory_space<vmem>>, vector<2x128xf32>,
    %55 = arith.truncf %52 : vector<2x128xf32> to vector<2x128xbf16>
    %56 = arith.index_cast %c0_i32_1 : i32 to index
    %c0_28 = arith.constant 0 : index
    %c0_29 = arith.constant 0 : index
    %57 = vector.load %arg3[%56, %c0_28, %c0_29] : memref<4x2x128xbf16, #tpu.memory_space<vmem>>, vector<1x2x128xbf16>
    %58 = vector.shape_cast %57 : vector<1x2x128xbf16> to vector<2x128xbf16>
    %59 = vector.shape_cast %55 : vector<2x128xbf16> to vector<1x2x128xbf16>
    tpu.vector_store %arg3[%56, %c0_28, %c0_29], %59 {strides = array<i32>} : memref<4x2x128xbf16, #tpu.memory_space<vmem>>, vector<1x2x128xbf16>,
    %c1_i32 = arith.constant 1 : i32
    %60 = arith.index_cast %c1_i32 : i32 to index
    %c0_30 = arith.constant 0 : index
    %c0_31 = arith.constant 0 : index
    %61 = vector.load %arg1[%60, %c0_30, %c0_31] : memref<4x2x512xbf16, #tpu.memory_space<vmem>>, vector<1x2x512xbf16>
    %62 = vector.shape_cast %61 : vector<1x2x512xbf16> to vector<2x512xbf16>
    %63 = arith.extf %62 : vector<2x512xbf16> to vector<2x512xf32>
    %c0_32 = arith.constant 0 : index
    %c0_33 = arith.constant 0 : index
    %64 = vector.load %arg4[%c0_32, %c0_33] : memref<2x128xf32, #tpu.memory_space<vmem>>, vector<2x128xf32>
    %65 = arith.truncf %64 : vector<2x128xf32> to vector<2x128xbf16>
    %66 = vector.extract_strided_slice %63 {offsets = [0, 0], sizes = [2, 128], strides = [1, 1]} : vector<2x512xf32> to vector<2x128xf32>
    %c0_34 = arith.constant 0 : index
    %c0_35 = arith.constant 0 : index
    %67 = vector.load %arg2[%c0_34, %c0_35] : memref<128x512xbf16, #tpu.memory_space<vmem>>, vector<128x128xbf16>
    %cst_36 = arith.constant dense<0.000000e+00> : vector<2x128xf32>
    %68 = tpu.matmul %65, %67, %cst_36 {dimension_numbers = #tpu.dot_dimension_numbers<[1], [0], [0], [1], [0, 0, 1, 1], [], []>} : vector<2x128xbf16>, vector<128x128xbf16>, vector<2x128xf32> -> vector<2x128xf32>
    %69 = arith.addf %66, %68 : vector<2x128xf32>
    %cst_37 = arith.constant 5.000000e-01 : f32
    %70 = vector.broadcast %cst_37 : f32 to vector<2x128xf32>
    %71 = arith.mulf %70, %69 : vector<2x128xf32>
    %72 = math.tanh %71 : vector<2x128xf32>
    %cst_38 = arith.constant 5.000000e-01 : f32
    %73 = vector.broadcast %cst_38 : f32 to vector<2x128xf32>
    %74 = arith.mulf %73, %72 : vector<2x128xf32>
    %cst_39 = arith.constant 5.000000e-01 : f32
    %75 = vector.broadcast %cst_39 : f32 to vector<2x128xf32>
    %76 = arith.addf %74, %75 : vector<2x128xf32>
    %77 = vector.extract_strided_slice %63 {offsets = [0, 128], sizes = [2, 128], strides = [1, 1]} : vector<2x512xf32> to vector<2x128xf32>
    %c0_40 = arith.constant 0 : index
    %c128_41 = arith.constant 128 : index
    %78 = vector.load %arg2[%c0_40, %c128_41] : memref<128x512xbf16, #tpu.memory_space<vmem>>, vector<128x128xbf16>
    %cst_42 = arith.constant dense<0.000000e+00> : vector<2x128xf32>
    %79 = tpu.matmul %65, %78, %cst_42 {dimension_numbers = #tpu.dot_dimension_numbers<[1], [0], [0], [1], [0, 0, 1, 1], [], []>} : vector<2x128xbf16>, vector<128x128xbf16>, vector<2x128xf32> -> vector<2x128xf32>
    %80 = arith.addf %77, %79 : vector<2x128xf32>
    %cst_43 = arith.constant 5.000000e-01 : f32
    %81 = vector.broadcast %cst_43 : f32 to vector<2x128xf32>
    %82 = arith.mulf %81, %80 : vector<2x128xf32>
    %83 = math.tanh %82 : vector<2x128xf32>
    %cst_44 = arith.constant 5.000000e-01 : f32
    %84 = vector.broadcast %cst_44 : f32 to vector<2x128xf32>
    %85 = arith.mulf %84, %83 : vector<2x128xf32>
    %cst_45 = arith.constant 5.000000e-01 : f32
    %86 = vector.broadcast %cst_45 : f32 to vector<2x128xf32>
    %87 = arith.addf %85, %86 : vector<2x128xf32>
    %88 = vector.extract_strided_slice %63 {offsets = [0, 256], sizes = [2, 128], strides = [1, 1]} : vector<2x512xf32> to vector<2x128xf32>
    %c0_46 = arith.constant 0 : index
    %c256_47 = arith.constant 256 : index
    %89 = vector.load %arg2[%c0_46, %c256_47] : memref<128x512xbf16, #tpu.memory_space<vmem>>, vector<128x128xbf16>
    %cst_48 = arith.constant dense<0.000000e+00> : vector<2x128xf32>
    %90 = tpu.matmul %65, %89, %cst_48 {dimension_numbers = #tpu.dot_dimension_numbers<[1], [0], [0], [1], [0, 0, 1, 1], [], []>} : vector<2x128xbf16>, vector<128x128xbf16>, vector<2x128xf32> -> vector<2x128xf32>
    %91 = arith.addf %88, %90 : vector<2x128xf32>
    %92 = math.tanh %91 : vector<2x128xf32>
    %c0_49 = arith.constant 0 : index
    %c0_50 = arith.constant 0 : index
    %93 = vector.load %arg5[%c0_49, %c0_50] : memref<2x128xf32, #tpu.memory_space<vmem>>, vector<2x128xf32>
    %94 = arith.mulf %87, %93 : vector<2x128xf32>
    %95 = arith.mulf %76, %92 : vector<2x128xf32>
    %96 = arith.addf %94, %95 : vector<2x128xf32>
    %97 = vector.extract_strided_slice %63 {offsets = [0, 384], sizes = [2, 128], strides = [1, 1]} : vector<2x512xf32> to vector<2x128xf32>
    %c0_51 = arith.constant 0 : index
    %c384_52 = arith.constant 384 : index
    %98 = vector.load %arg2[%c0_51, %c384_52] : memref<128x512xbf16, #tpu.memory_space<vmem>>, vector<128x128xbf16>
    %cst_53 = arith.constant dense<0.000000e+00> : vector<2x128xf32>
    %99 = tpu.matmul %65, %98, %cst_53 {dimension_numbers = #tpu.dot_dimension_numbers<[1], [0], [0], [1], [0, 0, 1, 1], [], []>} : vector<2x128xbf16>, vector<128x128xbf16>, vector<2x128xf32> -> vector<2x128xf32>
    %100 = arith.addf %97, %99 : vector<2x128xf32>
    %cst_54 = arith.constant 5.000000e-01 : f32
    %101 = vector.broadcast %cst_54 : f32 to vector<2x128xf32>
    %102 = arith.mulf %101, %100 : vector<2x128xf32>
    %103 = math.tanh %102 : vector<2x128xf32>
    %cst_55 = arith.constant 5.000000e-01 : f32
    %104 = vector.broadcast %cst_55 : f32 to vector<2x128xf32>
    %105 = arith.mulf %104, %103 : vector<2x128xf32>
    %cst_56 = arith.constant 5.000000e-01 : f32
    %106 = vector.broadcast %cst_56 : f32 to vector<2x128xf32>
    %107 = arith.addf %105, %106 : vector<2x128xf32>
    %108 = math.tanh %96 : vector<2x128xf32>
    %109 = arith.mulf %107, %108 : vector<2x128xf32>
    %c0_57 = arith.constant 0 : index
    %c0_58 = arith.constant 0 : index
    %110 = vector.load %arg5[%c0_57, %c0_58] : memref<2x128xf32, #tpu.memory_space<vmem>>, vector<2x128xf32>
    tpu.vector_store %arg5[%c0_57, %c0_58], %96 {strides = array<i32>} : memref<2x128xf32, #tpu.memory_space<vmem>>, vector<2x128xf32>,
    %c0_59 = arith.constant 0 : index
    %c0_60 = arith.constant 0 : index
    %111 = vector.load %arg4[%c0_59, %c0_60] : memref<2x128xf32, #tpu.memory_space<vmem>>, vector<2x128xf32>
    tpu.vector_store %arg4[%c0_59, %c0_60], %109 {strides = array<i32>} : memref<2x128xf32, #tpu.memory_space<vmem>>, vector<2x128xf32>,
    %112 = arith.truncf %109 : vector<2x128xf32> to vector<2x128xbf16>
    %113 = arith.index_cast %c1_i32 : i32 to index
    %c0_61 = arith.constant 0 : index
    %c0_62 = arith.constant 0 : index
    %114 = vector.load %arg3[%113, %c0_61, %c0_62] : memref<4x2x128xbf16, #tpu.memory_space<vmem>>, vector<1x2x128xbf16>
    %115 = vector.shape_cast %114 : vector<1x2x128xbf16> to vector<2x128xbf16>
    %116 = vector.shape_cast %112 : vector<2x128xbf16> to vector<1x2x128xbf16>
    tpu.vector_store %arg3[%113, %c0_61, %c0_62], %116 {strides = array<i32>} : memref<4x2x128xbf16, #tpu.memory_space<vmem>>, vector<1x2x128xbf16>,
    %c2_i32 = arith.constant 2 : i32
    %117 = arith.index_cast %c2_i32 : i32 to index
    %c0_63 = arith.constant 0 : index
    %c0_64 = arith.constant 0 : index
    %118 = vector.load %arg1[%117, %c0_63, %c0_64] : memref<4x2x512xbf16, #tpu.memory_space<vmem>>, vector<1x2x512xbf16>
    %119 = vector.shape_cast %118 : vector<1x2x512xbf16> to vector<2x512xbf16>
    %120 = arith.extf %119 : vector<2x512xbf16> to vector<2x512xf32>
    %c0_65 = arith.constant 0 : index
    %c0_66 = arith.constant 0 : index
    %121 = vector.load %arg4[%c0_65, %c0_66] : memref<2x128xf32, #tpu.memory_space<vmem>>, vector<2x128xf32>
    %122 = arith.truncf %121 : vector<2x128xf32> to vector<2x128xbf16>
    %123 = vector.extract_strided_slice %120 {offsets = [0, 0], sizes = [2, 128], strides = [1, 1]} : vector<2x512xf32> to vector<2x128xf32>
    %c0_67 = arith.constant 0 : index
    %c0_68 = arith.constant 0 : index
    %124 = vector.load %arg2[%c0_67, %c0_68] : memref<128x512xbf16, #tpu.memory_space<vmem>>, vector<128x128xbf16>
    %cst_69 = arith.constant dense<0.000000e+00> : vector<2x128xf32>
    %125 = tpu.matmul %122, %124, %cst_69 {dimension_numbers = #tpu.dot_dimension_numbers<[1], [0], [0], [1], [0, 0, 1, 1], [], []>} : vector<2x128xbf16>, vector<128x128xbf16>, vector<2x128xf32> -> vector<2x128xf32>
    %126 = arith.addf %123, %125 : vector<2x128xf32>
    %cst_70 = arith.constant 5.000000e-01 : f32
    %127 = vector.broadcast %cst_70 : f32 to vector<2x128xf32>
    %128 = arith.mulf %127, %126 : vector<2x128xf32>
    %129 = math.tanh %128 : vector<2x128xf32>
    %cst_71 = arith.constant 5.000000e-01 : f32
    %130 = vector.broadcast %cst_71 : f32 to vector<2x128xf32>
    %131 = arith.mulf %130, %129 : vector<2x128xf32>
    %cst_72 = arith.constant 5.000000e-01 : f32
    %132 = vector.broadcast %cst_72 : f32 to vector<2x128xf32>
    %133 = arith.addf %131, %132 : vector<2x128xf32>
    %134 = vector.extract_strided_slice %120 {offsets = [0, 128], sizes = [2, 128], strides = [1, 1]} : vector<2x512xf32> to vector<2x128xf32>
    %c0_73 = arith.constant 0 : index
    %c128_74 = arith.constant 128 : index
    %135 = vector.load %arg2[%c0_73, %c128_74] : memref<128x512xbf16, #tpu.memory_space<vmem>>, vector<128x128xbf16>
    %cst_75 = arith.constant dense<0.000000e+00> : vector<2x128xf32>
    %136 = tpu.matmul %122, %135, %cst_75 {dimension_numbers = #tpu.dot_dimension_numbers<[1], [0], [0], [1], [0, 0, 1, 1], [], []>} : vector<2x128xbf16>, vector<128x128xbf16>, vector<2x128xf32> -> vector<2x128xf32>
    %137 = arith.addf %134, %136 : vector<2x128xf32>
    %cst_76 = arith.constant 5.000000e-01 : f32
    %138 = vector.broadcast %cst_76 : f32 to vector<2x128xf32>
    %139 = arith.mulf %138, %137 : vector<2x128xf32>
    %140 = math.tanh %139 : vector<2x128xf32>
    %cst_77 = arith.constant 5.000000e-01 : f32
    %141 = vector.broadcast %cst_77 : f32 to vector<2x128xf32>
    %142 = arith.mulf %141, %140 : vector<2x128xf32>
    %cst_78 = arith.constant 5.000000e-01 : f32
    %143 = vector.broadcast %cst_78 : f32 to vector<2x128xf32>
    %144 = arith.addf %142, %143 : vector<2x128xf32>
    %145 = vector.extract_strided_slice %120 {offsets = [0, 256], sizes = [2, 128], strides = [1, 1]} : vector<2x512xf32> to vector<2x128xf32>
    %c0_79 = arith.constant 0 : index
    %c256_80 = arith.constant 256 : index
    %146 = vector.load %arg2[%c0_79, %c256_80] : memref<128x512xbf16, #tpu.memory_space<vmem>>, vector<128x128xbf16>
    %cst_81 = arith.constant dense<0.000000e+00> : vector<2x128xf32>
    %147 = tpu.matmul %122, %146, %cst_81 {dimension_numbers = #tpu.dot_dimension_numbers<[1], [0], [0], [1], [0, 0, 1, 1], [], []>} : vector<2x128xbf16>, vector<128x128xbf16>, vector<2x128xf32> -> vector<2x128xf32>
    %148 = arith.addf %145, %147 : vector<2x128xf32>
    %149 = math.tanh %148 : vector<2x128xf32>
    %c0_82 = arith.constant 0 : index
    %c0_83 = arith.constant 0 : index
    %150 = vector.load %arg5[%c0_82, %c0_83] : memref<2x128xf32, #tpu.memory_space<vmem>>, vector<2x128xf32>
    %151 = arith.mulf %144, %150 : vector<2x128xf32>
    %152 = arith.mulf %133, %149 : vector<2x128xf32>
    %153 = arith.addf %151, %152 : vector<2x128xf32>
    %154 = vector.extract_strided_slice %120 {offsets = [0, 384], sizes = [2, 128], strides = [1, 1]} : vector<2x512xf32> to vector<2x128xf32>
    %c0_84 = arith.constant 0 : index
    %c384_85 = arith.constant 384 : index
    %155 = vector.load %arg2[%c0_84, %c384_85] : memref<128x512xbf16, #tpu.memory_space<vmem>>, vector<128x128xbf16>
    %cst_86 = arith.constant dense<0.000000e+00> : vector<2x128xf32>
    %156 = tpu.matmul %122, %155, %cst_86 {dimension_numbers = #tpu.dot_dimension_numbers<[1], [0], [0], [1], [0, 0, 1, 1], [], []>} : vector<2x128xbf16>, vector<128x128xbf16>, vector<2x128xf32> -> vector<2x128xf32>
    %157 = arith.addf %154, %156 : vector<2x128xf32>
    %cst_87 = arith.constant 5.000000e-01 : f32
    %158 = vector.broadcast %cst_87 : f32 to vector<2x128xf32>
    %159 = arith.mulf %158, %157 : vector<2x128xf32>
    %160 = math.tanh %159 : vector<2x128xf32>
    %cst_88 = arith.constant 5.000000e-01 : f32
    %161 = vector.broadcast %cst_88 : f32 to vector<2x128xf32>
    %162 = arith.mulf %161, %160 : vector<2x128xf32>
    %cst_89 = arith.constant 5.000000e-01 : f32
    %163 = vector.broadcast %cst_89 : f32 to vector<2x128xf32>
    %164 = arith.addf %162, %163 : vector<2x128xf32>
    %165 = math.tanh %153 : vector<2x128xf32>
    %166 = arith.mulf %164, %165 : vector<2x128xf32>
    %c0_90 = arith.constant 0 : index
    %c0_91 = arith.constant 0 : index
    %167 = vector.load %arg5[%c0_90, %c0_91] : memref<2x128xf32, #tpu.memory_space<vmem>>, vector<2x128xf32>
    tpu.vector_store %arg5[%c0_90, %c0_91], %153 {strides = array<i32>} : memref<2x128xf32, #tpu.memory_space<vmem>>, vector<2x128xf32>,
    %c0_92 = arith.constant 0 : index
    %c0_93 = arith.constant 0 : index
    %168 = vector.load %arg4[%c0_92, %c0_93] : memref<2x128xf32, #tpu.memory_space<vmem>>, vector<2x128xf32>
    tpu.vector_store %arg4[%c0_92, %c0_93], %166 {strides = array<i32>} : memref<2x128xf32, #tpu.memory_space<vmem>>, vector<2x128xf32>,
    %169 = arith.truncf %166 : vector<2x128xf32> to vector<2x128xbf16>
    %170 = arith.index_cast %c2_i32 : i32 to index
    %c0_94 = arith.constant 0 : index
    %c0_95 = arith.constant 0 : index
    %171 = vector.load %arg3[%170, %c0_94, %c0_95] : memref<4x2x128xbf16, #tpu.memory_space<vmem>>, vector<1x2x128xbf16>
    %172 = vector.shape_cast %171 : vector<1x2x128xbf16> to vector<2x128xbf16>
    %173 = vector.shape_cast %169 : vector<2x128xbf16> to vector<1x2x128xbf16>
    tpu.vector_store %arg3[%170, %c0_94, %c0_95], %173 {strides = array<i32>} : memref<4x2x128xbf16, #tpu.memory_space<vmem>>, vector<1x2x128xbf16>,
    %c3_i32 = arith.constant 3 : i32
    %174 = arith.index_cast %c3_i32 : i32 to index
    %c0_96 = arith.constant 0 : index
    %c0_97 = arith.constant 0 : index
    %175 = vector.load %arg1[%174, %c0_96, %c0_97] : memref<4x2x512xbf16, #tpu.memory_space<vmem>>, vector<1x2x512xbf16>
    %176 = vector.shape_cast %175 : vector<1x2x512xbf16> to vector<2x512xbf16>
    %177 = arith.extf %176 : vector<2x512xbf16> to vector<2x512xf32>
    %c0_98 = arith.constant 0 : index
    %c0_99 = arith.constant 0 : index
    %178 = vector.load %arg4[%c0_98, %c0_99] : memref<2x128xf32, #tpu.memory_space<vmem>>, vector<2x128xf32>
    %179 = arith.truncf %178 : vector<2x128xf32> to vector<2x128xbf16>
    %180 = vector.extract_strided_slice %177 {offsets = [0, 0], sizes = [2, 128], strides = [1, 1]} : vector<2x512xf32> to vector<2x128xf32>
    %c0_100 = arith.constant 0 : index
    %c0_101 = arith.constant 0 : index
    %181 = vector.load %arg2[%c0_100, %c0_101] : memref<128x512xbf16, #tpu.memory_space<vmem>>, vector<128x128xbf16>
    %cst_102 = arith.constant dense<0.000000e+00> : vector<2x128xf32>
    %182 = tpu.matmul %179, %181, %cst_102 {dimension_numbers = #tpu.dot_dimension_numbers<[1], [0], [0], [1], [0, 0, 1, 1], [], []>} : vector<2x128xbf16>, vector<128x128xbf16>, vector<2x128xf32> -> vector<2x128xf32>
    %183 = arith.addf %180, %182 : vector<2x128xf32>
    %cst_103 = arith.constant 5.000000e-01 : f32
    %184 = vector.broadcast %cst_103 : f32 to vector<2x128xf32>
    %185 = arith.mulf %184, %183 : vector<2x128xf32>
    %186 = math.tanh %185 : vector<2x128xf32>
    %cst_104 = arith.constant 5.000000e-01 : f32
    %187 = vector.broadcast %cst_104 : f32 to vector<2x128xf32>
    %188 = arith.mulf %187, %186 : vector<2x128xf32>
    %cst_105 = arith.constant 5.000000e-01 : f32
    %189 = vector.broadcast %cst_105 : f32 to vector<2x128xf32>
    %190 = arith.addf %188, %189 : vector<2x128xf32>
    %191 = vector.extract_strided_slice %177 {offsets = [0, 128], sizes = [2, 128], strides = [1, 1]} : vector<2x512xf32> to vector<2x128xf32>
    %c0_106 = arith.constant 0 : index
    %c128_107 = arith.constant 128 : index
    %192 = vector.load %arg2[%c0_106, %c128_107] : memref<128x512xbf16, #tpu.memory_space<vmem>>, vector<128x128xbf16>
    %cst_108 = arith.constant dense<0.000000e+00> : vector<2x128xf32>
    %193 = tpu.matmul %179, %192, %cst_108 {dimension_numbers = #tpu.dot_dimension_numbers<[1], [0], [0], [1], [0, 0, 1, 1], [], []>} : vector<2x128xbf16>, vector<128x128xbf16>, vector<2x128xf32> -> vector<2x128xf32>
    %194 = arith.addf %191, %193 : vector<2x128xf32>
    %cst_109 = arith.constant 5.000000e-01 : f32
    %195 = vector.broadcast %cst_109 : f32 to vector<2x128xf32>
    %196 = arith.mulf %195, %194 : vector<2x128xf32>
    %197 = math.tanh %196 : vector<2x128xf32>
    %cst_110 = arith.constant 5.000000e-01 : f32
    %198 = vector.broadcast %cst_110 : f32 to vector<2x128xf32>
    %199 = arith.mulf %198, %197 : vector<2x128xf32>
    %cst_111 = arith.constant 5.000000e-01 : f32
    %200 = vector.broadcast %cst_111 : f32 to vector<2x128xf32>
    %201 = arith.addf %199, %200 : vector<2x128xf32>
    %202 = vector.extract_strided_slice %177 {offsets = [0, 256], sizes = [2, 128], strides = [1, 1]} : vector<2x512xf32> to vector<2x128xf32>
    %c0_112 = arith.constant 0 : index
    %c256_113 = arith.constant 256 : index
    %203 = vector.load %arg2[%c0_112, %c256_113] : memref<128x512xbf16, #tpu.memory_space<vmem>>, vector<128x128xbf16>
    %cst_114 = arith.constant dense<0.000000e+00> : vector<2x128xf32>
    %204 = tpu.matmul %179, %203, %cst_114 {dimension_numbers = #tpu.dot_dimension_numbers<[1], [0], [0], [1], [0, 0, 1, 1], [], []>} : vector<2x128xbf16>, vector<128x128xbf16>, vector<2x128xf32> -> vector<2x128xf32>
    %205 = arith.addf %202, %204 : vector<2x128xf32>
    %206 = math.tanh %205 : vector<2x128xf32>
    %c0_115 = arith.constant 0 : index
    %c0_116 = arith.constant 0 : index
    %207 = vector.load %arg5[%c0_115, %c0_116] : memref<2x128xf32, #tpu.memory_space<vmem>>, vector<2x128xf32>
    %208 = arith.mulf %201, %207 : vector<2x128xf32>
    %209 = arith.mulf %190, %206 : vector<2x128xf32>
    %210 = arith.addf %208, %209 : vector<2x128xf32>
    %211 = vector.extract_strided_slice %177 {offsets = [0, 384], sizes = [2, 128], strides = [1, 1]} : vector<2x512xf32> to vector<2x128xf32>
    %c0_117 = arith.constant 0 : index
    %c384_118 = arith.constant 384 : index
    %212 = vector.load %arg2[%c0_117, %c384_118] : memref<128x512xbf16, #tpu.memory_space<vmem>>, vector<128x128xbf16>
    %cst_119 = arith.constant dense<0.000000e+00> : vector<2x128xf32>
    %213 = tpu.matmul %179, %212, %cst_119 {dimension_numbers = #tpu.dot_dimension_numbers<[1], [0], [0], [1], [0, 0, 1, 1], [], []>} : vector<2x128xbf16>, vector<128x128xbf16>, vector<2x128xf32> -> vector<2x128xf32>
    %214 = arith.addf %211, %213 : vector<2x128xf32>
    %cst_120 = arith.constant 5.000000e-01 : f32
    %215 = vector.broadcast %cst_120 : f32 to vector<2x128xf32>
    %216 = arith.mulf %215, %214 : vector<2x128xf32>
    %217 = math.tanh %216 : vector<2x128xf32>
    %cst_121 = arith.constant 5.000000e-01 : f32
    %218 = vector.broadcast %cst_121 : f32 to vector<2x128xf32>
    %219 = arith.mulf %218, %217 : vector<2x128xf32>
    %cst_122 = arith.constant 5.000000e-01 : f32
    %220 = vector.broadcast %cst_122 : f32 to vector<2x128xf32>
    %221 = arith.addf %219, %220 : vector<2x128xf32>
    %222 = math.tanh %210 : vector<2x128xf32>
    %223 = arith.mulf %221, %222 : vector<2x128xf32>
    %c0_123 = arith.constant 0 : index
    %c0_124 = arith.constant 0 : index
    %224 = vector.load %arg5[%c0_123, %c0_124] : memref<2x128xf32, #tpu.memory_space<vmem>>, vector<2x128xf32>
    tpu.vector_store %arg5[%c0_123, %c0_124], %210 {strides = array<i32>} : memref<2x128xf32, #tpu.memory_space<vmem>>, vector<2x128xf32>,
    %c0_125 = arith.constant 0 : index
    %c0_126 = arith.constant 0 : index
    %225 = vector.load %arg4[%c0_125, %c0_126] : memref<2x128xf32, #tpu.memory_space<vmem>>, vector<2x128xf32>
    tpu.vector_store %arg4[%c0_125, %c0_126], %223 {strides = array<i32>} : memref<2x128xf32, #tpu.memory_space<vmem>>, vector<2x128xf32>,
    %226 = arith.truncf %223 : vector<2x128xf32> to vector<2x128xbf16>
    %227 = arith.index_cast %c3_i32 : i32 to index
    %c0_127 = arith.constant 0 : index
    %c0_128 = arith.constant 0 : index
    %228 = vector.load %arg3[%227, %c0_127, %c0_128] : memref<4x2x128xbf16, #tpu.memory_space<vmem>>, vector<1x2x128xbf16>
    %229 = vector.shape_cast %228 : vector<1x2x128xbf16> to vector<2x128xbf16>
    %230 = vector.shape_cast %226 : vector<2x128xbf16> to vector<1x2x128xbf16>
    tpu.vector_store %arg3[%227, %c0_127, %c0_128], %230 {strides = array<i32>} : memref<4x2x128xbf16, #tpu.memory_space<vmem>>, vector<1x2x128xbf16>,
    %c4_i32 = arith.constant 4 : i32
    return
  }
  func.func @transform_0(%arg0: i32) -> (i32, i32, i32) {
    %c0_i32 = arith.constant 0 : i32
    %c0_i32_0 = arith.constant 0 : i32
    %c0_i32_1 = arith.constant 0 : i32
    return %arg0, %c0_i32, %c0_i32_0 : i32, i32, i32
  }
  func.func @transform_1(%arg0: i32) -> (i32, i32) {
    %c0_i32 = arith.constant 0 : i32
    %c0_i32_0 = arith.constant 0 : i32
    %c0_i32_1 = arith.constant 0 : i32
    return %c0_i32, %c0_i32_0 : i32, i32
  }
  func.func @transform_2(%arg0: i32) -> (i32, i32, i32) {
    %c0_i32 = arith.constant 0 : i32
    %c0_i32_0 = arith.constant 0 : i32
    %c0_i32_1 = arith.constant 0 : i32
    return %arg0, %c0_i32, %c0_i32_0 : i32, i32, i32
  }
}

</mosaic_0001>

<llo_original>
// kernel: client_lstm_forward.1
$region0: #{client_lstm_forward.1}
  #allocation0 [shape = 'u32[]', space=smem, size = 0x4, offset = 0x4, fixed_abs, tag = 'smem constant byte address 0x4 - core index']
  #allocation1 [shape = 'u32[72,128]{1,0:T(1,128)}', space=vmem, size = 0x9000, scoped, tag = 'internal scratch']
  #allocation2 [shape = 'f32[2,128]{1,0:T(2,128)}', space=vmem, size = 0x400, scoped, tag = 'scratch operand']
  #allocation3 [shape = 'f32[2,128]{1,0:T(2,128)}', space=vmem, size = 0x400, scoped, tag = 'scratch operand']
  %s0 = inlined_call_operand.vmem [shape: bf16[8,2,512], index: 0, kind: input, shape index: {}]
  %s1 = inlined_call_operand.vmem [shape: bf16[128,512], index: 1, kind: input, shape index: {}]
  %s2 = inlined_call_operand.vmem [shape: bf16[8,2,128], index: 2, kind: output, shape index: {}]
  %s3 = sld [smem:[#allocation0]]
  $region45: #{client_lstm_forward.1} parent=0
    _
  %s5 = ssub.s32 1, %s3
  %s6 = scalar_select 0, %s5, %s3
  loop: start=0, step=1, limit=4
  $region2: #{client_lstm_forward.1} parent=0 // loop_pre_header
    _
  $region3: #{client_lstm_forward.1} parent=0 // loop_header
    %s8 = sphi 0, %s12
    %p9 = scmp.ge.s32.totalorder %s8, 4
    %s18 = sphi 0, %s20
    %s21 = sphi 0, %s18
    %s22 = sphi 0, %s21
    %s38 = sphi 0, %s22
    %s42 = sphi 0, %s42
    %s44 = sphi 0, %s42
    %s45 = sphi 0, %s44
    %s59 = sphi 0, %s45
    %s65 = sphi 0, %s67
    %s68 = sphi 0, %s65
    %s69 = sphi 0, %s68
    %s85 = sphi 0, %s69
  $region4: #{client_lstm_forward.1} parent=0 // loop_header_branch
    %11 = sbr.rel (%p9) target = $region8
  $region5: #{client_lstm_forward.1} parent=0 // loop_body
    %s13 = ssub.s32 %s8, 1
    %s14 = ssub.s32 %s8, 2
    %s15 = sadd.s32 %s8, 1
    %s16 = ssub.s32 %s8, %s15
    %p17 = scmp.eq.s32.totalorder %s16, 0
    %s19 = sadd.s32 %s18, 1
    %s20 = scalar_select %p17, %s18, %s19
    %p23 = pneg %p17
    %p24 = scmp.eq.s32.totalorder %s8, 1
    %p25 = por %p23, %p24
    %p26 = scmp.ne.s32.totalorder %s18, %s21
    %p27 = scmp.eq.s32.totalorder %s8, 0
    %p28 = por %p26, %p27
    %p29 = scmp.ne.s32.totalorder %s18, %s21
    %p30 = scmp.eq.s32.totalorder %s13, 1
    %p31 = por %p29, %p30
    %p32 = scmp.ne.s32.totalorder %s21, %s22
    %p33 = scmp.eq.s32.totalorder %s13, 0
    %p34 = por %p32, %p33
    %p35 = scmp.ne.s32.totalorder %s21, %s22
    %p36 = scmp.eq.s32.totalorder %s14, 1
    %p37 = por %p35, %p36
    %p39 = scmp.ne.s32.totalorder %s22, %s38
    %p40 = scmp.eq.s32.totalorder %s14, 0
    %p41 = por %p39, %p40
    %s43 = sadd.s32 %s42, 1
    %p46 = scmp.eq.s32.totalorder %s8, 1
    %p47 = scmp.ne.s32.totalorder %s42, %s44
    %p48 = scmp.eq.s32.totalorder %s8, 0
    %p49 = por %p47, %p48
    %p50 = scmp.ne.s32.totalorder %s42, %s44
    %p51 = scmp.eq.s32.totalorder %s13, 1
    %p52 = por %p50, %p51
    %p53 = scmp.ne.s32.totalorder %s44, %s45
    %p54 = scmp.eq.s32.totalorder %s13, 0
    %p55 = por %p53, %p54
    %p56 = scmp.ne.s32.totalorder %s44, %s45
    %p57 = scmp.eq.s32.totalorder %s14, 1
    %p58 = por %p56, %p57
    %p60 = scmp.ne.s32.totalorder %s45, %s59
    %p61 = scmp.eq.s32.totalorder %s14, 0
    %p62 = por %p60, %p61
    %s63 = ssub.s32 %s8, %s15
    %p64 = scmp.eq.s32.totalorder %s63, 0
    %s66 = sadd.s32 %s65, 1
    %s67 = scalar_select %p64, %s65, %s66
    %p70 = pneg %p64
    %p71 = scmp.eq.s32.totalorder %s8, 1
    %p72 = por %p70, %p71
    %p73 = scmp.ne.s32.totalorder %s65, %s68
    %p74 = scmp.eq.s32.totalorder %s8, 0
    %p75 = por %p73, %p74
    %p76 = scmp.ne.s32.totalorder %s65, %s68
    %p77 = scmp.eq.s32.totalorder %s13, 1
    %p78 = por %p76, %p77
    %p79 = scmp.ne.s32.totalorder %s68, %s69
    %p80 = scmp.eq.s32.totalorder %s13, 0
    %p81 = por %p79, %p80
    %p82 = scmp.ne.s32.totalorder %s68, %s69
    %p83 = scmp.eq.s32.totalorder %s14, 1
    %p84 = por %p82, %p83
    %p86 = scmp.ne.s32.totalorder %s69, %s85
    %p87 = scmp.eq.s32.totalorder %s14, 0
    %p88 = por %p86, %p87
    %p89 = scmp.le.s32.totalorder 1, %s8
    %p90 = scmp.lt.s32.totalorder %s8, 3
    %p91 = pnand %p89, %p90
    %p92 = pneg %p91
    // Predicated region
    $region9: #{client_lstm_forward.1} parent=5 // pred_check
      _
    $region10: #{client_lstm_forward.1} parent=5 // pred_check_branch
      %94 = sbr.rel (%p91) target = $region12
    $region11: #{client_lstm_forward.1} parent=5 // pred_region
      %s95 = ssub.s32 %s8, 1
      // Predicated region
      $region13: #{client_lstm_forward.1} parent=11 // pred_check
        %p96 = pneg %p55
      $region14: #{client_lstm_forward.1} parent=11 // pred_check_branch
        %98 = sbr.rel (%p96) target = $region16
      $region15: #{client_lstm_forward.1} parent=11 // pred_region
        _
      $region16: #{client_lstm_forward.1} parent=11 // pred_fallthru
        _
    $region12: #{client_lstm_forward.1} parent=5 // pred_fallthru
      _
    %p99 = scmp.lt.s32.totalorder %s8, 2
    // Predicated region
    $region17: #{client_lstm_forward.1} parent=5 // pred_check
      %p100 = pneg %p99
    $region18: #{client_lstm_forward.1} parent=5 // pred_check_branch
      %102 = sbr.rel (%p100) target = $region20
    $region19: #{client_lstm_forward.1} parent=5 // pred_region
      // Predicated region
      $region21: #{client_lstm_forward.1} parent=19 // pred_check
        %p103 = pneg %p28
      $region22: #{client_lstm_forward.1} parent=19 // pred_check_branch
        %105 = sbr.rel (%p103) target = $region24
      $region23: #{client_lstm_forward.1} parent=19 // pred_region
        %s106 = smul.u32 4, %s8
        %p107 = scmp.lt.s32.totalorder %s106, 7
        %s108 = scalar_select %p107, %s106, 7
        %s109 = smul.addr %s108, 4
        %s110 = scalar_lea.vmem %s0, %s109
        %s111 = smul.u32 4, %s8
      $region24: #{client_lstm_forward.1} parent=19 // pred_fallthru
        _
    $region20: #{client_lstm_forward.1} parent=5 // pred_fallthru
      _
    %p112 = scmp.le.s32.totalorder 1, %s8
    %p113 = scmp.lt.s32.totalorder %s8, 3
    %p114 = pnand %p112, %p113
    %p115 = pneg %p114
    // Predicated region
    $region25: #{client_lstm_forward.1} parent=5 // pred_check
      _
    $region26: #{client_lstm_forward.1} parent=5 // pred_check_branch
      %117 = sbr.rel (%p114) target = $region28
    $region27: #{client_lstm_forward.1} parent=5 // pred_region
      %s118 = ssub.s32 %s8, 1
      %s119 = smul.u32 4, %s13
      %p120 = scmp.lt.s32.totalorder %s119, 7
      %s121 = scalar_select %p120, %s119, 7
      %s122 = smul.addr %s121, 4
      %s123 = scalar_lea.vmem %s0, %s122
      %p124 = pneg %p34
      %p125 = pneg %p31
      %p126 = pneg %p55
      %p127 = pneg %p52
      %p128 = pneg %p81
      %p129 = pneg %p78
      %s130 = smul.u32 4, %s13
      %p131 = scmp.lt.s32.totalorder %s130, 7
      %s132 = scalar_select %p131, %s130, 7
      %s133 = scalar_lea.vmem %s2, %s132
      %s134 = smul.u32 4, %s13
      %p135 = scmp.lt.s32.totalorder %s134, 7
      %s136 = scalar_select %p135, %s134, 7
      %s137 = smul.addr %s136, 4
      %s138 = scalar_lea.vmem %s0, %s137
      %s139 = smul.u32 4, %s13
      %s140 = smul.u32 4, %s13
      %p141 = scmp.lt.s32.totalorder %s140, 7
      %s142 = scalar_select %p141, %s140, 7
      %s143 = scalar_lea.vmem %s2, %s142
      %s144 = smul.u32 4, %s13
      %p145 = scmp.eq.s32.totalorder %s13, 0
      // Predicated region
      $region29: #{client_lstm_forward.1} parent=27 // pred_check
        %p146 = pneg %p145
      $region30: #{client_lstm_forward.1} parent=27 // pred_check_branch
        %148 = sbr.rel (%p146) target = $region32
      $region31: #{client_lstm_forward.1} parent=27 // pred_region
        %149 = vst [vmem:[#allocation2] sm:$0x3] 0.0
        %150 = vst [vmem:[#allocation3] sm:$0x3] 0.0
      $region32: #{client_lstm_forward.1} parent=27 // pred_fallthru
        _
      %v151 = vld [vmem:[%s138] sm:$0xf]
      %v152 = vunpack.c.l.bf16 %v151
      %v153 = vld [vmem:[#allocation2] sm:$0x3]
      %v154 = vpack.c.bf16 %v153, %v153
      %v155 = vld [vmem:[%s1] sm:$0xf]
      %v156 = vld [vmem:[%s1 + $0x10] sm:$0xf]
      %v157 = vld [vmem:[%s1 + $0x20] sm:$0xf]
      %v158 = vld [vmem:[%s1 + $0x30] sm:$0xf]
      %v159 = vld [vmem:[%s1 + $0x40] sm:$0xf]
      %v160 = vld [vmem:[%s1 + $0x50] sm:$0xf]
      %v161 = vld [vmem:[%s1 + $0x60] sm:$0xf]
      %v162 = vld [vmem:[%s1 + $0x70] sm:$0xf]
      %v163 = vld [vmem:[%s1 + $0x80] sm:$0xf]
      %v164 = vld [vmem:[%s1 + $0x90] sm:$0xf]
      %v165 = vld [vmem:[%s1 + $0xa0] sm:$0xf]
      %v166 = vld [vmem:[%s1 + $0xb0] sm:$0xf]
      %v167 = vld [vmem:[%s1 + $0xc0] sm:$0xf]
      %v168 = vld [vmem:[%s1 + $0xd0] sm:$0xf]
      %v169 = vld [vmem:[%s1 + $0xe0] sm:$0xf]
      %v170 = vld [vmem:[%s1 + $0xf0] sm:$0xf]
      %v187 = vunpack.c.l.b16 %v155
      %v188 = vunpack.c.l.b16 %v156
      %v189 = vunpack.c.l.b16 %v157
      %v190 = vunpack.c.l.b16 %v158
      %v191 = vunpack.c.l.b16 %v159
      %v192 = vunpack.c.l.b16 %v160
      %v193 = vunpack.c.l.b16 %v161
      %v194 = vunpack.c.l.b16 %v162
      %v195 = vunpack.c.l.b16 %v163
      %v196 = vunpack.c.l.b16 %v164
      %v197 = vunpack.c.l.b16 %v165
      %v198 = vunpack.c.l.b16 %v166
      %v199 = vunpack.c.l.b16 %v167
      %v200 = vunpack.c.l.b16 %v168
      %v201 = vunpack.c.l.b16 %v169
      %v202 = vunpack.c.l.b16 %v170
      %v203 = vpack.c.b16 %v188, %v187
      %v204 = vpack.c.b16 %v190, %v189
      %v205 = vpack.c.b16 %v192, %v191
      %v206 = vpack.c.b16 %v194, %v193
      %v207 = vpack.c.b16 %v196, %v195
      %v208 = vpack.c.b16 %v198, %v197
      %v209 = vpack.c.b16 %v200, %v199
      %v210 = vpack.c.b16 %v202, %v201
      %219 = vmatpush.bf16.msra.mxu0 %v210
      %220 = vmatpush.bf16.msra.mxu0 %v209
      %221 = vmatpush.bf16.msra.mxu0 %v208
      %222 = vmatpush.bf16.msra.mxu0 %v207
      %223 = vmatpush.bf16.msra.mxu0 %v206
      %224 = vmatpush.bf16.msra.mxu0 %v205
      %225 = vmatpush.bf16.msra.mxu0 %v204
      %226 = vmatpush.bf16.msra.mxu0 %v203
      %227 = vmatmul.bf16.gmra.mxu0 %v154
      %v228 = vpop.f32.mrf.mxu0
      %v229 = vadd.f32 0.0, %v228
      %v230 = vpop.f32.mrf.mxu0
      %231 = vdwg.mxu0
      %v232 = vadd.f32 %v152, %v229
      %v233 = vmul.f32 %v232, 0.5
      %v234 = vtanh.pop %v233
      %v235 = vmul.f32 %v234, 0.5
      %v236 = vadd.f32 %v235, 0.5
      %v237 = vld [vmem:[%s1 + $0x4] sm:$0xf]
      %v238 = vld [vmem:[%s1 + $0x14] sm:$0xf]
      %v239 = vld [vmem:[%s1 + $0x24] sm:$0xf]
      %v240 = vld [vmem:[%s1 + $0x34] sm:$0xf]
      %v241 = vld [vmem:[%s1 + $0x44] sm:$0xf]
      %v242 = vld [vmem:[%s1 + $0x54] sm:$0xf]
      %v243 = vld [vmem:[%s1 + $0x64] sm:$0xf]
      %v244 = vld [vmem:[%s1 + $0x74] sm:$0xf]
      %v245 = vld [vmem:[%s1 + $0x84] sm:$0xf]
      %v246 = vld [vmem:[%s1 + $0x94] sm:$0xf]
      %v247 = vld [vmem:[%s1 + $0xa4] sm:$0xf]
      %v248 = vld [vmem:[%s1 + $0xb4] sm:$0xf]
      %v249 = vld [vmem:[%s1 + $0xc4] sm:$0xf]
      %v250 = vld [vmem:[%s1 + $0xd4] sm:$0xf]
      %v251 = vld [vmem:[%s1 + $0xe4] sm:$0xf]
      %v252 = vld [vmem:[%s1 + $0xf4] sm:$0xf]
      %v269 = vunpack.c.l.b16 %v237
      %v270 = vunpack.c.l.b16 %v238
      %v271 = vunpack.c.l.b16 %v239
      %v272 = vunpack.c.l.b16 %v240
      %v273 = vunpack.c.l.b16 %v241
      %v274 = vunpack.c.l.b16 %v242
      %v275 = vunpack.c.l.b16 %v243
      %v276 = vunpack.c.l.b16 %v244
      %v277 = vunpack.c.l.b16 %v245
      %v278 = vunpack.c.l.b16 %v246
      %v279 = vunpack.c.l.b16 %v247
      %v280 = vunpack.c.l.b16 %v248
      %v281 = vunpack.c.l.b16 %v249
      %v282 = vunpack.c.l.b16 %v250
      %v283 = vunpack.c.l.b16 %v251
      %v284 = vunpack.c.l.b16 %v252
      %v285 = vpack.c.b16 %v270, %v269
      %v286 = vpack.c.b16 %v272, %v271
      %v287 = vpack.c.b16 %v274, %v273
      %v288 = vpack.c.b16 %v276, %v275
      %v289 = vpack.c.b16 %v278, %v277
      %v290 = vpack.c.b16 %v280, %v279
      %v291 = vpack.c.b16 %v282, %v281
      %v292 = vpack.c.b16 %v284, %v283
      %301 = vmatpush.bf16.msra.mxu0 %v292
      %302 = vmatpush.bf16.msra.mxu0 %v291
      %303 = vmatpush.bf16.msra.mxu0 %v290
      %304 = vmatpush.bf16.msra.mxu0 %v289
      %305 = vmatpush.bf16.msra.mxu0 %v288
      %306 = vmatpush.bf16.msra.mxu0 %v287
      %307 = vmatpush.bf16.msra.mxu0 %v286
      %308 = vmatpush.bf16.msra.mxu0 %v285
      %309 = vmatmul.bf16.gmra.mxu0 %v154
      %v310 = vpop.f32.mrf.mxu0
      %v311 = vadd.f32 0.0, %v310
      %v312 = vpop.f32.mrf.mxu0
      %313 = vdwg.mxu0
      %v315 = vrot.slane %v152, 2
      %v317 = vadd.f32 %v315, %v311
      %v318 = vmul.f32 %v317, 0.5
      %v319 = vtanh.pop %v318
      %v320 = vmul.f32 %v319, 0.5
      %v321 = vadd.f32 %v320, 0.5
      %v322 = vld [vmem:[%s1 + $0x8] sm:$0xf]
      %v323 = vld [vmem:[%s1 + $0x18] sm:$0xf]
      %v324 = vld [vmem:[%s1 + $0x28] sm:$0xf]
      %v325 = vld [vmem:[%s1 + $0x38] sm:$0xf]
      %v326 = vld [vmem:[%s1 + $0x48] sm:$0xf]
      %v327 = vld [vmem:[%s1 + $0x58] sm:$0xf]
      %v328 = vld [vmem:[%s1 + $0x68] sm:$0xf]
      %v329 = vld [vmem:[%s1 + $0x78] sm:$0xf]
      %v330 = vld [vmem:[%s1 + $0x88] sm:$0xf]
      %v331 = vld [vmem:[%s1 + $0x98] sm:$0xf]
      %v332 = vld [vmem:[%s1 + $0xa8] sm:$0xf]
      %v333 = vld [vmem:[%s1 + $0xb8] sm:$0xf]
      %v334 = vld [vmem:[%s1 + $0xc8] sm:$0xf]
      %v335 = vld [vmem:[%s1 + $0xd8] sm:$0xf]
      %v336 = vld [vmem:[%s1 + $0xe8] sm:$0xf]
      %v337 = vld [vmem:[%s1 + $0xf8] sm:$0xf]
      %v354 = vunpack.c.l.b16 %v322
      %v355 = vunpack.c.l.b16 %v323
      %v356 = vunpack.c.l.b16 %v324
      %v357 = vunpack.c.l.b16 %v325
      %v358 = vunpack.c.l.b16 %v326
      %v359 = vunpack.c.l.b16 %v327
      %v360 = vunpack.c.l.b16 %v328
      %v361 = vunpack.c.l.b16 %v329
      %v362 = vunpack.c.l.b16 %v330
      %v363 = vunpack.c.l.b16 %v331
      %v364 = vunpack.c.l.b16 %v332
      %v365 = vunpack.c.l.b16 %v333
      %v366 = vunpack.c.l.b16 %v334
      %v367 = vunpack.c.l.b16 %v335
      %v368 = vunpack.c.l.b16 %v336
      %v369 = vunpack.c.l.b16 %v337
      %v370 = vpack.c.b16 %v355, %v354
      %v371 = vpack.c.b16 %v357, %v356
      %v372 = vpack.c.b16 %v359, %v358
      %v373 = vpack.c.b16 %v361, %v360
      %v374 = vpack.c.b16 %v363, %v362
      %v375 = vpack.c.b16 %v365, %v364
      %v376 = vpack.c.b16 %v367, %v366
      %v377 = vpack.c.b16 %v369, %v368
      %386 = vmatpush.bf16.msra.mxu0 %v377
      %387 = vmatpush.bf16.msra.mxu0 %v376
      %388 = vmatpush.bf16.msra.mxu0 %v375
      %389 = vmatpush.bf16.msra.mxu0 %v374
      %390 = vmatpush.bf16.msra.mxu0 %v373
      %391 = vmatpush.bf16.msra.mxu0 %v372
      %392 = vmatpush.bf16.msra.mxu0 %v371
      %393 = vmatpush.bf16.msra.mxu0 %v370
      %394 = vmatmul.bf16.gmra.mxu0 %v154
      %v395 = vpop.f32.mrf.mxu0
      %v396 = vadd.f32 0.0, %v395
      %v397 = vpop.f32.mrf.mxu0
      %398 = vdwg.mxu0
      %v399 = vrot.slane %v152, 4
      %v401 = vadd.f32 %v399, %v396
      %v402 = vtanh.pop %v401
      %v403 = vld [vmem:[#allocation3] sm:$0x3]
      %v404 = vmul.f32 %v321, %v403
      %v405 = vmul.f32 %v236, %v402
      %v406 = vadd.f32 %v404, %v405
      %v407 = vld [vmem:[%s1 + $0xc] sm:$0xf]
      %v408 = vld [vmem:[%s1 + $0x1c] sm:$0xf]
      %v409 = vld [vmem:[%s1 + $0x2c] sm:$0xf]
      %v410 = vld [vmem:[%s1 + $0x3c] sm:$0xf]
      %v411 = vld [vmem:[%s1 + $0x4c] sm:$0xf]
      %v412 = vld [vmem:[%s1 + $0x5c] sm:$0xf]
      %v413 = vld [vmem:[%s1 + $0x6c] sm:$0xf]
      %v414 = vld [vmem:[%s1 + $0x7c] sm:$0xf]
      %v415 = vld [vmem:[%s1 + $0x8c] sm:$0xf]
      %v416 = vld [vmem:[%s1 + $0x9c] sm:$0xf]
      %v417 = vld [vmem:[%s1 + $0xac] sm:$0xf]
      %v418 = vld [vmem:[%s1 + $0xbc] sm:$0xf]
      %v419 = vld [vmem:[%s1 + $0xcc] sm:$0xf]
      %v420 = vld [vmem:[%s1 + $0xdc] sm:$0xf]
      %v421 = vld [vmem:[%s1 + $0xec] sm:$0xf]
      %v422 = vld [vmem:[%s1 + $0xfc] sm:$0xf]
      %v439 = vunpack.c.l.b16 %v407
      %v440 = vunpack.c.l.b16 %v408
      %v441 = vunpack.c.l.b16 %v409
      %v442 = vunpack.c.l.b16 %v410
      %v443 = vunpack.c.l.b16 %v411
      %v444 = vunpack.c.l.b16 %v412
      %v445 = vunpack.c.l.b16 %v413
      %v446 = vunpack.c.l.b16 %v414
      %v447 = vunpack.c.l.b16 %v415
      %v448 = vunpack.c.l.b16 %v416
      %v449 = vunpack.c.l.b16 %v417
      %v450 = vunpack.c.l.b16 %v418
      %v451 = vunpack.c.l.b16 %v419
      %v452 = vunpack.c.l.b16 %v420
      %v453 = vunpack.c.l.b16 %v421
      %v454 = vunpack.c.l.b16 %v422
      %v455 = vpack.c.b16 %v440, %v439
      %v456 = vpack.c.b16 %v442, %v441
      %v457 = vpack.c.b16 %v444, %v443
      %v458 = vpack.c.b16 %v446, %v445
      %v459 = vpack.c.b16 %v448, %v447
      %v460 = vpack.c.b16 %v450, %v449
      %v461 = vpack.c.b16 %v452, %v451
      %v462 = vpack.c.b16 %v454, %v453
      %471 = vmatpush.bf16.msra.mxu0 %v462
      %472 = vmatpush.bf16.msra.mxu0 %v461
      %473 = vmatpush.bf16.msra.mxu0 %v460
      %474 = vmatpush.bf16.msra.mxu0 %v459
      %475 = vmatpush.bf16.msra.mxu0 %v458
      %476 = vmatpush.bf16.msra.mxu0 %v457
      %477 = vmatpush.bf16.msra.mxu0 %v456
      %478 = vmatpush.bf16.msra.mxu0 %v455
      %479 = vmatmul.bf16.gmra.mxu0 %v154
      %v480 = vpop.f32.mrf.mxu0
      %v481 = vadd.f32 0.0, %v480
      %v482 = vpop.f32.mrf.mxu0
      %483 = vdwg.mxu0
      %v484 = vrot.slane %v152, 6
      %v486 = vadd.f32 %v484, %v481
      %v487 = vmul.f32 %v486, 0.5
      %v488 = vtanh.pop %v487
      %v489 = vmul.f32 %v488, 0.5
      %v490 = vadd.f32 %v489, 0.5
      %v491 = vtanh.pop %v406
      %v492 = vmul.f32 %v490, %v491
      %493 = vst [vmem:[#allocation3] sm:$0x3] %v406
      %494 = vst [vmem:[#allocation2] sm:$0x3] %v492
      %v495 = vpack.c.bf16 %v492, %v492
      %496 = vst [vmem:[%s143] sm:$0x1] %v495
      %s497 = scalar_lea.vmem %s138, 4
      %v498 = vld [vmem:[%s497] sm:$0xf]
      %v499 = vunpack.c.l.bf16 %v498
      %v500 = vld [vmem:[#allocation2] sm:$0x3]
      %v501 = vpack.c.bf16 %v500, %v500
      %v502 = vld [vmem:[%s1] sm:$0xf]
      %v503 = vld [vmem:[%s1 + $0x10] sm:$0xf]
      %v504 = vld [vmem:[%s1 + $0x20] sm:$0xf]
      %v505 = vld [vmem:[%s1 + $0x30] sm:$0xf]
      %v506 = vld [vmem:[%s1 + $0x40] sm:$0xf]
      %v507 = vld [vmem:[%s1 + $0x50] sm:$0xf]
      %v508 = vld [vmem:[%s1 + $0x60] sm:$0xf]
      %v509 = vld [vmem:[%s1 + $0x70] sm:$0xf]
      %v510 = vld [vmem:[%s1 + $0x80] sm:$0xf]
      %v511 = vld [vmem:[%s1 + $0x90] sm:$0xf]
      %v512 = vld [vmem:[%s1 + $0xa0] sm:$0xf]
      %v513 = vld [vmem:[%s1 + $0xb0] sm:$0xf]
      %v514 = vld [vmem:[%s1 + $0xc0] sm:$0xf]
      %v515 = vld [vmem:[%s1 + $0xd0] sm:$0xf]
      %v516 = vld [vmem:[%s1 + $0xe0] sm:$0xf]
      %v517 = vld [vmem:[%s1 + $0xf0] sm:$0xf]
      %v534 = vunpack.c.l.b16 %v502
      %v535 = vunpack.c.l.b16 %v503
      %v536 = vunpack.c.l.b16 %v504
      %v537 = vunpack.c.l.b16 %v505
      %v538 = vunpack.c.l.b16 %v506
      %v539 = vunpack.c.l.b16 %v507
      %v540 = vunpack.c.l.b16 %v508
      %v541 = vunpack.c.l.b16 %v509
      %v542 = vunpack.c.l.b16 %v510
      %v543 = vunpack.c.l.b16 %v511
      %v544 = vunpack.c.l.b16 %v512
      %v545 = vunpack.c.l.b16 %v513
      %v546 = vunpack.c.l.b16 %v514
      %v547 = vunpack.c.l.b16 %v515
      %v548 = vunpack.c.l.b16 %v516
      %v549 = vunpack.c.l.b16 %v517
      %v550 = vpack.c.b16 %v535, %v534
      %v551 = vpack.c.b16 %v537, %v536
      %v552 = vpack.c.b16 %v539, %v538
      %v553 = vpack.c.b16 %v541, %v540
      %v554 = vpack.c.b16 %v543, %v542
      %v555 = vpack.c.b16 %v545, %v544
      %v556 = vpack.c.b16 %v547, %v546
      %v557 = vpack.c.b16 %v549, %v548
      %566 = vmatpush.bf16.msra.mxu0 %v557
      %567 = vmatpush.bf16.msra.mxu0 %v556
      %568 = vmatpush.bf16.msra.mxu0 %v555
      %569 = vmatpush.bf16.msra.mxu0 %v554
      %570 = vmatpush.bf16.msra.mxu0 %v553
      %571 = vmatpush.bf16.msra.mxu0 %v552
      %572 = vmatpush.bf16.msra.mxu0 %v551
      %573 = vmatpush.bf16.msra.mxu0 %v550
      %574 = vmatmul.bf16.gmra.mxu0 %v501
      %v575 = vpop.f32.mrf.mxu0
      %v576 = vadd.f32 0.0, %v575
      %v577 = vpop.f32.mrf.mxu0
      %578 = vdwg.mxu0
      %v579 = vadd.f32 %v499, %v576
      %v580 = vmul.f32 %v579, 0.5
      %v581 = vtanh.pop %v580
      %v582 = vmul.f32 %v581, 0.5
      %v583 = vadd.f32 %v582, 0.5
      %v584 = vld [vmem:[%s1 + $0x4] sm:$0xf]
      %v585 = vld [vmem:[%s1 + $0x14] sm:$0xf]
      %v586 = vld [vmem:[%s1 + $0x24] sm:$0xf]
      %v587 = vld [vmem:[%s1 + $0x34] sm:$0xf]
      %v588 = vld [vmem:[%s1 + $0x44] sm:$0xf]
      %v589 = vld [vmem:[%s1 + $0x54] sm:$0xf]
      %v590 = vld [vmem:[%s1 + $0x64] sm:$0xf]
      %v591 = vld [vmem:[%s1 + $0x74] sm:$0xf]
      %v592 = vld [vmem:[%s1 + $0x84] sm:$0xf]
      %v593 = vld [vmem:[%s1 + $0x94] sm:$0xf]
      %v594 = vld [vmem:[%s1 + $0xa4] sm:$0xf]
      %v595 = vld [vmem:[%s1 + $0xb4] sm:$0xf]
      %v596 = vld [vmem:[%s1 + $0xc4] sm:$0xf]
      %v597 = vld [vmem:[%s1 + $0xd4] sm:$0xf]
      %v598 = vld [vmem:[%s1 + $0xe4] sm:$0xf]
      %v599 = vld [vmem:[%s1 + $0xf4] sm:$0xf]
      %v616 = vunpack.c.l.b16 %v584
      %v617 = vunpack.c.l.b16 %v585
      %v618 = vunpack.c.l.b16 %v586
      %v619 = vunpack.c.l.b16 %v587
      %v620 = vunpack.c.l.b16 %v588
      %v621 = vunpack.c.l.b16 %v589
      %v622 = vunpack.c.l.b16 %v590
      %v623 = vunpack.c.l.b16 %v591
      %v624 = vunpack.c.l.b16 %v592
      %v625 = vunpack.c.l.b16 %v593
      %v626 = vunpack.c.l.b16 %v594
      %v627 = vunpack.c.l.b16 %v595
      %v628 = vunpack.c.l.b16 %v596
      %v629 = vunpack.c.l.b16 %v597
      %v630 = vunpack.c.l.b16 %v598
      %v631 = vunpack.c.l.b16 %v599
      %v632 = vpack.c.b16 %v617, %v616
      %v633 = vpack.c.b16 %v619, %v618
      %v634 = vpack.c.b16 %v621, %v620
      %v635 = vpack.c.b16 %v623, %v622
      %v636 = vpack.c.b16 %v625, %v624
      %v637 = vpack.c.b16 %v627, %v626
      %v638 = vpack.c.b16 %v629, %v628
      %v639 = vpack.c.b16 %v631, %v630
      %648 = vmatpush.bf16.msra.mxu0 %v639
      %649 = vmatpush.bf16.msra.mxu0 %v638
      %650 = vmatpush.bf16.msra.mxu0 %v637
      %651 = vmatpush.bf16.msra.mxu0 %v636
      %652 = vmatpush.bf16.msra.mxu0 %v635
      %653 = vmatpush.bf16.msra.mxu0 %v634
      %654 = vmatpush.bf16.msra.mxu0 %v633
      %655 = vmatpush.bf16.msra.mxu0 %v632
      %656 = vmatmul.bf16.gmra.mxu0 %v501
      %v657 = vpop.f32.mrf.mxu0
      %v658 = vadd.f32 0.0, %v657
      %v659 = vpop.f32.mrf.mxu0
      %660 = vdwg.mxu0
      %v662 = vrot.slane %v499, 2
      %v664 = vadd.f32 %v662, %v658
      %v665 = vmul.f32 %v664, 0.5
      %v666 = vtanh.pop %v665
      %v667 = vmul.f32 %v666, 0.5
      %v668 = vadd.f32 %v667, 0.5
      %v669 = vld [vmem:[%s1 + $0x8] sm:$0xf]
      %v670 = vld [vmem:[%s1 + $0x18] sm:$0xf]
      %v671 = vld [vmem:[%s1 + $0x28] sm:$0xf]
      %v672 = vld [vmem:[%s1 + $0x38] sm:$0xf]
      %v673 = vld [vmem:[%s1 + $0x48] sm:$0xf]
      %v674 = vld [vmem:[%s1 + $0x58] sm:$0xf]
      %v675 = vld [vmem:[%s1 + $0x68] sm:$0xf]
      %v676 = vld [vmem:[%s1 + $0x78] sm:$0xf]
      %v677 = vld [vmem:[%s1 + $0x88] sm:$0xf]
      %v678 = vld [vmem:[%s1 + $0x98] sm:$0xf]
      %v679 = vld [vmem:[%s1 + $0xa8] sm:$0xf]
      %v680 = vld [vmem:[%s1 + $0xb8] sm:$0xf]
      %v681 = vld [vmem:[%s1 + $0xc8] sm:$0xf]
      %v682 = vld [vmem:[%s1 + $0xd8] sm:$0xf]
      %v683 = vld [vmem:[%s1 + $0xe8] sm:$0xf]
      %v684 = vld [vmem:[%s1 + $0xf8] sm:$0xf]
      %v701 = vunpack.c.l.b16 %v669
      %v702 = vunpack.c.l.b16 %v670
      %v703 = vunpack.c.l.b16 %v671
      %v704 = vunpack.c.l.b16 %v672
      %v705 = vunpack.c.l.b16 %v673
      %v706 = vunpack.c.l.b16 %v674
      %v707 = vunpack.c.l.b16 %v675
      %v708 = vunpack.c.l.b16 %v676
      %v709 = vunpack.c.l.b16 %v677
      %v710 = vunpack.c.l.b16 %v678
      %v711 = vunpack.c.l.b16 %v679
      %v712 = vunpack.c.l.b16 %v680
      %v713 = vunpack.c.l.b16 %v681
      %v714 = vunpack.c.l.b16 %v682
      %v715 = vunpack.c.l.b16 %v683
      %v716 = vunpack.c.l.b16 %v684
      %v717 = vpack.c.b16 %v702, %v701
      %v718 = vpack.c.b16 %v704, %v703
      %v719 = vpack.c.b16 %v706, %v705
      %v720 = vpack.c.b16 %v708, %v707
      %v721 = vpack.c.b16 %v710, %v709
      %v722 = vpack.c.b16 %v712, %v711
      %v723 = vpack.c.b16 %v714, %v713
      %v724 = vpack.c.b16 %v716, %v715
      %733 = vmatpush.bf16.msra.mxu0 %v724
      %734 = vmatpush.bf16.msra.mxu0 %v723
      %735 = vmatpush.bf16.msra.mxu0 %v722
      %736 = vmatpush.bf16.msra.mxu0 %v721
      %737 = vmatpush.bf16.msra.mxu0 %v720
      %738 = vmatpush.bf16.msra.mxu0 %v719
      %739 = vmatpush.bf16.msra.mxu0 %v718
      %740 = vmatpush.bf16.msra.mxu0 %v717
      %741 = vmatmul.bf16.gmra.mxu0 %v501
      %v742 = vpop.f32.mrf.mxu0
      %v743 = vadd.f32 0.0, %v742
      %v744 = vpop.f32.mrf.mxu0
      %745 = vdwg.mxu0
      %v746 = vrot.slane %v499, 4
      %v748 = vadd.f32 %v746, %v743
      %v749 = vtanh.pop %v748
      %v750 = vld [vmem:[#allocation3] sm:$0x3]
      %v751 = vmul.f32 %v668, %v750
      %v752 = vmul.f32 %v583, %v749
      %v753 = vadd.f32 %v751, %v752
      %v754 = vld [vmem:[%s1 + $0xc] sm:$0xf]
      %v755 = vld [vmem:[%s1 + $0x1c] sm:$0xf]
      %v756 = vld [vmem:[%s1 + $0x2c] sm:$0xf]
      %v757 = vld [vmem:[%s1 + $0x3c] sm:$0xf]
      %v758 = vld [vmem:[%s1 + $0x4c] sm:$0xf]
      %v759 = vld [vmem:[%s1 + $0x5c] sm:$0xf]
      %v760 = vld [vmem:[%s1 + $0x6c] sm:$0xf]
      %v761 = vld [vmem:[%s1 + $0x7c] sm:$0xf]
      %v762 = vld [vmem:[%s1 + $0x8c] sm:$0xf]
      %v763 = vld [vmem:[%s1 + $0x9c] sm:$0xf]
      %v764 = vld [vmem:[%s1 + $0xac] sm:$0xf]
      %v765 = vld [vmem:[%s1 + $0xbc] sm:$0xf]
      %v766 = vld [vmem:[%s1 + $0xcc] sm:$0xf]
      %v767 = vld [vmem:[%s1 + $0xdc] sm:$0xf]
      %v768 = vld [vmem:[%s1 + $0xec] sm:$0xf]
      %v769 = vld [vmem:[%s1 + $0xfc] sm:$0xf]
      %v786 = vunpack.c.l.b16 %v754
      %v787 = vunpack.c.l.b16 %v755
      %v788 = vunpack.c.l.b16 %v756
      %v789 = vunpack.c.l.b16 %v757
      %v790 = vunpack.c.l.b16 %v758
      %v791 = vunpack.c.l.b16 %v759
      %v792 = vunpack.c.l.b16 %v760
      %v793 = vunpack.c.l.b16 %v761
      %v794 = vunpack.c.l.b16 %v762
      %v795 = vunpack.c.l.b16 %v763
      %v796 = vunpack.c.l.b16 %v764
      %v797 = vunpack.c.l.b16 %v765
      %v798 = vunpack.c.l.b16 %v766
      %v799 = vunpack.c.l.b16 %v767
      %v800 = vunpack.c.l.b16 %v768
      %v801 = vunpack.c.l.b16 %v769
      %v802 = vpack.c.b16 %v787, %v786
      %v803 = vpack.c.b16 %v789, %v788
      %v804 = vpack.c.b16 %v791, %v790
      %v805 = vpack.c.b16 %v793, %v792
      %v806 = vpack.c.b16 %v795, %v794
      %v807 = vpack.c.b16 %v797, %v796
      %v808 = vpack.c.b16 %v799, %v798
      %v809 = vpack.c.b16 %v801, %v800
      %818 = vmatpush.bf16.msra.mxu0 %v809
      %819 = vmatpush.bf16.msra.mxu0 %v808
      %820 = vmatpush.bf16.msra.mxu0 %v807
      %821 = vmatpush.bf16.msra.mxu0 %v806
      %822 = vmatpush.bf16.msra.mxu0 %v805
      %823 = vmatpush.bf16.msra.mxu0 %v804
      %824 = vmatpush.bf16.msra.mxu0 %v803
      %825 = vmatpush.bf16.msra.mxu0 %v802
      %826 = vmatmul.bf16.gmra.mxu0 %v501
      %v827 = vpop.f32.mrf.mxu0
      %v828 = vadd.f32 0.0, %v827
      %v829 = vpop.f32.mrf.mxu0
      %830 = vdwg.mxu0
      %v831 = vrot.slane %v499, 6
      %v833 = vadd.f32 %v831, %v828
      %v834 = vmul.f32 %v833, 0.5
      %v835 = vtanh.pop %v834
      %v836 = vmul.f32 %v835, 0.5
      %v837 = vadd.f32 %v836, 0.5
      %v838 = vtanh.pop %v753
      %v839 = vmul.f32 %v837, %v838
      %840 = vst [vmem:[#allocation3] sm:$0x3] %v753
      %841 = vst [vmem:[#allocation2] sm:$0x3] %v839
      %v842 = vpack.c.bf16 %v839, %v839
      %s843 = scalar_lea.vmem %s143, 1
      %844 = vst [vmem:[%s843] sm:$0x1] %v842
      %s845 = scalar_lea.vmem %s138, 8
      %v846 = vld [vmem:[%s845] sm:$0xf]
      %v847 = vunpack.c.l.bf16 %v846
      %v848 = vld [vmem:[#allocation2] sm:$0x3]
      %v849 = vpack.c.bf16 %v848, %v848
      %v850 = vld [vmem:[%s1] sm:$0xf]
      %v851 = vld [vmem:[%s1 + $0x10] sm:$0xf]
      %v852 = vld [vmem:[%s1 + $0x20] sm:$0xf]
      %v853 = vld [vmem:[%s1 + $0x30] sm:$0xf]
      %v854 = vld [vmem:[%s1 + $0x40] sm:$0xf]
      %v855 = vld [vmem:[%s1 + $0x50] sm:$0xf]
      %v856 = vld [vmem:[%s1 + $0x60] sm:$0xf]
      %v857 = vld [vmem:[%s1 + $0x70] sm:$0xf]
      %v858 = vld [vmem:[%s1 + $0x80] sm:$0xf]
      %v859 = vld [vmem:[%s1 + $0x90] sm:$0xf]
      %v860 = vld [vmem:[%s1 + $0xa0] sm:$0xf]
      %v861 = vld [vmem:[%s1 + $0xb0] sm:$0xf]
      %v862 = vld [vmem:[%s1 + $0xc0] sm:$0xf]
      %v863 = vld [vmem:[%s1 + $0xd0] sm:$0xf]
      %v864 = vld [vmem:[%s1 + $0xe0] sm:$0xf]
      %v865 = vld [vmem:[%s1 + $0xf0] sm:$0xf]
      %v882 = vunpack.c.l.b16 %v850
      %v883 = vunpack.c.l.b16 %v851
      %v884 = vunpack.c.l.b16 %v852
      %v885 = vunpack.c.l.b16 %v853
      %v886 = vunpack.c.l.b16 %v854
      %v887 = vunpack.c.l.b16 %v855
      %v888 = vunpack.c.l.b16 %v856
      %v889 = vunpack.c.l.b16 %v857
      %v890 = vunpack.c.l.b16 %v858
      %v891 = vunpack.c.l.b16 %v859
      %v892 = vunpack.c.l.b16 %v860
      %v893 = vunpack.c.l.b16 %v861
      %v894 = vunpack.c.l.b16 %v862
      %v895 = vunpack.c.l.b16 %v863
      %v896 = vunpack.c.l.b16 %v864
      %v897 = vunpack.c.l.b16 %v865
      %v898 = vpack.c.b16 %v883, %v882
      %v899 = vpack.c.b16 %v885, %v884
      %v900 = vpack.c.b16 %v887, %v886
      %v901 = vpack.c.b16 %v889, %v888
      %v902 = vpack.c.b16 %v891, %v890
      %v903 = vpack.c.b16 %v893, %v892
      %v904 = vpack.c.b16 %v895, %v894
      %v905 = vpack.c.b16 %v897, %v896
      %914 = vmatpush.bf16.msra.mxu0 %v905
      %915 = vmatpush.bf16.msra.mxu0 %v904
      %916 = vmatpush.bf16.msra.mxu0 %v903
      %917 = vmatpush.bf16.msra.mxu0 %v902
      %918 = vmatpush.bf16.msra.mxu0 %v901
      %919 = vmatpush.bf16.msra.mxu0 %v900
      %920 = vmatpush.bf16.msra.mxu0 %v899
      %921 = vmatpush.bf16.msra.mxu0 %v898
      %922 = vmatmul.bf16.gmra.mxu0 %v849
      %v923 = vpop.f32.mrf.mxu0
      %v924 = vadd.f32 0.0, %v923
      %v925 = vpop.f32.mrf.mxu0
      %926 = vdwg.mxu0
      %v927 = vadd.f32 %v847, %v924
      %v928 = vmul.f32 %v927, 0.5
      %v929 = vtanh.pop %v928
      %v930 = vmul.f32 %v929, 0.5
      %v931 = vadd.f32 %v930, 0.5
      %v932 = vld [vmem:[%s1 + $0x4] sm:$0xf]
      %v933 = vld [vmem:[%s1 + $0x14] sm:$0xf]
      %v934 = vld [vmem:[%s1 + $0x24] sm:$0xf]
      %v935 = vld [vmem:[%s1 + $0x34] sm:$0xf]
      %v936 = vld [vmem:[%s1 + $0x44] sm:$0xf]
      %v937 = vld [vmem:[%s1 + $0x54] sm:$0xf]
      %v938 = vld [vmem:[%s1 + $0x64] sm:$0xf]
      %v939 = vld [vmem:[%s1 + $0x74] sm:$0xf]
      %v940 = vld [vmem:[%s1 + $0x84] sm:$0xf]
      %v941 = vld [vmem:[%s1 + $0x94] sm:$0xf]
      %v942 = vld [vmem:[%s1 + $0xa4] sm:$0xf]
      %v943 = vld [vmem:[%s1 + $0xb4] sm:$0xf]
      %v944 = vld [vmem:[%s1 + $0xc4] sm:$0xf]
      %v945 = vld [vmem:[%s1 + $0xd4] sm:$0xf]
      %v946 = vld [vmem:[%s1 + $0xe4] sm:$0xf]
      %v947 = vld [vmem:[%s1 + $0xf4] sm:$0xf]
      %v964 = vunpack.c.l.b16 %v932
      %v965 = vunpack.c.l.b16 %v933
      %v966 = vunpack.c.l.b16 %v934
      %v967 = vunpack.c.l.b16 %v935
      %v968 = vunpack.c.l.b16 %v936
      %v969 = vunpack.c.l.b16 %v937
      %v970 = vunpack.c.l.b16 %v938
      %v971 = vunpack.c.l.b16 %v939
      %v972 = vunpack.c.l.b16 %v940
      %v973 = vunpack.c.l.b16 %v941
      %v974 = vunpack.c.l.b16 %v942
      %v975 = vunpack.c.l.b16 %v943
      %v976 = vunpack.c.l.b16 %v944
      %v977 = vunpack.c.l.b16 %v945
      %v978 = vunpack.c.l.b16 %v946
      %v979 = vunpack.c.l.b16 %v947
      %v980 = vpack.c.b16 %v965, %v964
      %v981 = vpack.c.b16 %v967, %v966
      %v982 = vpack.c.b16 %v969, %v968
      %v983 = vpack.c.b16 %v971, %v970
      %v984 = vpack.c.b16 %v973, %v972
      %v985 = vpack.c.b16 %v975, %v974
      %v986 = vpack.c.b16 %v977, %v976
      %v987 = vpack.c.b16 %v979, %v978
      %996 = vmatpush.bf16.msra.mxu0 %v987
      %997 = vmatpush.bf16.msra.mxu0 %v986
      %998 = vmatpush.bf16.msra.mxu0 %v985
      %999 = vmatpush.bf16.msra.mxu0 %v984
      %1000 = vmatpush.bf16.msra.mxu0 %v983
      %1001 = vmatpush.bf16.msra.mxu0 %v982
      %1002 = vmatpush.bf16.msra.mxu0 %v981
      %1003 = vmatpush.bf16.msra.mxu0 %v980
      %1004 = vmatmul.bf16.gmra.mxu0 %v849
      %v1005 = vpop.f32.mrf.mxu0
      %v1006 = vadd.f32 0.0, %v1005
      %v1007 = vpop.f32.mrf.mxu0
      %1008 = vdwg.mxu0
      %v1010 = vrot.slane %v847, 2
      %v1012 = vadd.f32 %v1010, %v1006
      %v1013 = vmul.f32 %v1012, 0.5
      %v1014 = vtanh.pop %v1013
      %v1015 = vmul.f32 %v1014, 0.5
      %v1016 = vadd.f32 %v1015, 0.5
      %v1017 = vld [vmem:[%s1 + $0x8] sm:$0xf]
      %v1018 = vld [vmem:[%s1 + $0x18] sm:$0xf]
      %v1019 = vld [vmem:[%s1 + $0x28] sm:$0xf]
      %v1020 = vld [vmem:[%s1 + $0x38] sm:$0xf]
      %v1021 = vld [vmem:[%s1 + $0x48] sm:$0xf]
      %v1022 = vld [vmem:[%s1 + $0x58] sm:$0xf]
      %v1023 = vld [vmem:[%s1 + $0x68] sm:$0xf]
      %v1024 = vld [vmem:[%s1 + $0x78] sm:$0xf]
      %v1025 = vld [vmem:[%s1 + $0x88] sm:$0xf]
      %v1026 = vld [vmem:[%s1 + $0x98] sm:$0xf]
      %v1027 = vld [vmem:[%s1 + $0xa8] sm:$0xf]
      %v1028 = vld [vmem:[%s1 + $0xb8] sm:$0xf]
      %v1029 = vld [vmem:[%s1 + $0xc8] sm:$0xf]
      %v1030 = vld [vmem:[%s1 + $0xd8] sm:$0xf]
      %v1031 = vld [vmem:[%s1 + $0xe8] sm:$0xf]
      %v1032 = vld [vmem:[%s1 + $0xf8] sm:$0xf]
      %v1049 = vunpack.c.l.b16 %v1017
      %v1050 = vunpack.c.l.b16 %v1018
      %v1051 = vunpack.c.l.b16 %v1019
      %v1052 = vunpack.c.l.b16 %v1020
      %v1053 = vunpack.c.l.b16 %v1021
      %v1054 = vunpack.c.l.b16 %v1022
      %v1055 = vunpack.c.l.b16 %v1023
      %v1056 = vunpack.c.l.b16 %v1024
      %v1057 = vunpack.c.l.b16 %v1025
      %v1058 = vunpack.c.l.b16 %v1026
      %v1059 = vunpack.c.l.b16 %v1027
      %v1060 = vunpack.c.l.b16 %v1028
      %v1061 = vunpack.c.l.b16 %v1029
      %v1062 = vunpack.c.l.b16 %v1030
      %v1063 = vunpack.c.l.b16 %v1031
      %v1064 = vunpack.c.l.b16 %v1032
      %v1065 = vpack.c.b16 %v1050, %v1049
      %v1066 = vpack.c.b16 %v1052, %v1051
      %v1067 = vpack.c.b16 %v1054, %v1053
      %v1068 = vpack.c.b16 %v1056, %v1055
      %v1069 = vpack.c.b16 %v1058, %v1057
      %v1070 = vpack.c.b16 %v1060, %v1059
      %v1071 = vpack.c.b16 %v1062, %v1061
      %v1072 = vpack.c.b16 %v1064, %v1063
      %1081 = vmatpush.bf16.msra.mxu0 %v1072
      %1082 = vmatpush.bf16.msra.mxu0 %v1071
      %1083 = vmatpush.bf16.msra.mxu0 %v1070
      %1084 = vmatpush.bf16.msra.mxu0 %v1069
      %1085 = vmatpush.bf16.msra.mxu0 %v1068
      %1086 = vmatpush.bf16.msra.mxu0 %v1067
      %1087 = vmatpush.bf16.msra.mxu0 %v1066
      %1088 = vmatpush.bf16.msra.mxu0 %v1065
      %1089 = vmatmul.bf16.gmra.mxu0 %v849
      %v1090 = vpop.f32.mrf.mxu0
      %v1091 = vadd.f32 0.0, %v1090
      %v1092 = vpop.f32.mrf.mxu0
      %1093 = vdwg.mxu0
      %v1094 = vrot.slane %v847, 4
      %v1096 = vadd.f32 %v1094, %v1091
      %v1097 = vtanh.pop %v1096
      %v1098 = vld [vmem:[#allocation3] sm:$0x3]
      %v1099 = vmul.f32 %v1016, %v1098
      %v1100 = vmul.f32 %v931, %v1097
      %v1101 = vadd.f32 %v1099, %v1100
      %v1102 = vld [vmem:[%s1 + $0xc] sm:$0xf]
      %v1103 = vld [vmem:[%s1 + $0x1c] sm:$0xf]
      %v1104 = vld [vmem:[%s1 + $0x2c] sm:$0xf]
      %v1105 = vld [vmem:[%s1 + $0x3c] sm:$0xf]
      %v1106 = vld [vmem:[%s1 + $0x4c] sm:$0xf]
      %v1107 = vld [vmem:[%s1 + $0x5c] sm:$0xf]
      %v1108 = vld [vmem:[%s1 + $0x6c] sm:$0xf]
      %v1109 = vld [vmem:[%s1 + $0x7c] sm:$0xf]
      %v1110 = vld [vmem:[%s1 + $0x8c] sm:$0xf]
      %v1111 = vld [vmem:[%s1 + $0x9c] sm:$0xf]
      %v1112 = vld [vmem:[%s1 + $0xac] sm:$0xf]
      %v1113 = vld [vmem:[%s1 + $0xbc] sm:$0xf]
      %v1114 = vld [vmem:[%s1 + $0xcc] sm:$0xf]
      %v1115 = vld [vmem:[%s1 + $0xdc] sm:$0xf]
      %v1116 = vld [vmem:[%s1 + $0xec] sm:$0xf]
      %v1117 = vld [vmem:[%s1 + $0xfc] sm:$0xf]
      %v1134 = vunpack.c.l.b16 %v1102
      %v1135 = vunpack.c.l.b16 %v1103
      %v1136 = vunpack.c.l.b16 %v1104
      %v1137 = vunpack.c.l.b16 %v1105
      %v1138 = vunpack.c.l.b16 %v1106
      %v1139 = vunpack.c.l.b16 %v1107
      %v1140 = vunpack.c.l.b16 %v1108
      %v1141 = vunpack.c.l.b16 %v1109
      %v1142 = vunpack.c.l.b16 %v1110
      %v1143 = vunpack.c.l.b16 %v1111
      %v1144 = vunpack.c.l.b16 %v1112
      %v1145 = vunpack.c.l.b16 %v1113
      %v1146 = vunpack.c.l.b16 %v1114
      %v1147 = vunpack.c.l.b16 %v1115
      %v1148 = vunpack.c.l.b16 %v1116
      %v1149 = vunpack.c.l.b16 %v1117
      %v1150 = vpack.c.b16 %v1135, %v1134
      %v1151 = vpack.c.b16 %v1137, %v1136
      %v1152 = vpack.c.b16 %v1139, %v1138
      %v1153 = vpack.c.b16 %v1141, %v1140
      %v1154 = vpack.c.b16 %v1143, %v1142
      %v1155 = vpack.c.b16 %v1145, %v1144
      %v1156 = vpack.c.b16 %v1147, %v1146
      %v1157 = vpack.c.b16 %v1149, %v1148
      %1166 = vmatpush.bf16.msra.mxu0 %v1157
      %1167 = vmatpush.bf16.msra.mxu0 %v1156
      %1168 = vmatpush.bf16.msra.mxu0 %v1155
      %1169 = vmatpush.bf16.msra.mxu0 %v1154
      %1170 = vmatpush.bf16.msra.mxu0 %v1153
      %1171 = vmatpush.bf16.msra.mxu0 %v1152
      %1172 = vmatpush.bf16.msra.mxu0 %v1151
      %1173 = vmatpush.bf16.msra.mxu0 %v1150
      %1174 = vmatmul.bf16.gmra.mxu0 %v849
      %v1175 = vpop.f32.mrf.mxu0
      %v1176 = vadd.f32 0.0, %v1175
      %v1177 = vpop.f32.mrf.mxu0
      %1178 = vdwg.mxu0
      %v1179 = vrot.slane %v847, 6
      %v1181 = vadd.f32 %v1179, %v1176
      %v1182 = vmul.f32 %v1181, 0.5
      %v1183 = vtanh.pop %v1182
      %v1184 = vmul.f32 %v1183, 0.5
      %v1185 = vadd.f32 %v1184, 0.5
      %v1186 = vtanh.pop %v1101
      %v1187 = vmul.f32 %v1185, %v1186
      %1188 = vst [vmem:[#allocation3] sm:$0x3] %v1101
      %1189 = vst [vmem:[#allocation2] sm:$0x3] %v1187
      %v1190 = vpack.c.bf16 %v1187, %v1187
      %s1191 = scalar_lea.vmem %s143, 2
      %1192 = vst [vmem:[%s1191] sm:$0x1] %v1190
      %s1193 = scalar_lea.vmem %s138, 12
      %v1194 = vld [vmem:[%s1193] sm:$0xf]
      %v1195 = vunpack.c.l.bf16 %v1194
      %v1196 = vld [vmem:[#allocation2] sm:$0x3]
      %v1197 = vpack.c.bf16 %v1196, %v1196
      %v1198 = vld [vmem:[%s1] sm:$0xf]
      %v1199 = vld [vmem:[%s1 + $0x10] sm:$0xf]
      %v1200 = vld [vmem:[%s1 + $0x20] sm:$0xf]
      %v1201 = vld [vmem:[%s1 + $0x30] sm:$0xf]
      %v1202 = vld [vmem:[%s1 + $0x40] sm:$0xf]
      %v1203 = vld [vmem:[%s1 + $0x50] sm:$0xf]
      %v1204 = vld [vmem:[%s1 + $0x60] sm:$0xf]
      %v1205 = vld [vmem:[%s1 + $0x70] sm:$0xf]
      %v1206 = vld [vmem:[%s1 + $0x80] sm:$0xf]
      %v1207 = vld [vmem:[%s1 + $0x90] sm:$0xf]
      %v1208 = vld [vmem:[%s1 + $0xa0] sm:$0xf]
      %v1209 = vld [vmem:[%s1 + $0xb0] sm:$0xf]
      %v1210 = vld [vmem:[%s1 + $0xc0] sm:$0xf]
      %v1211 = vld [vmem:[%s1 + $0xd0] sm:$0xf]
      %v1212 = vld [vmem:[%s1 + $0xe0] sm:$0xf]
      %v1213 = vld [vmem:[%s1 + $0xf0] sm:$0xf]
      %v1230 = vunpack.c.l.b16 %v1198
      %v1231 = vunpack.c.l.b16 %v1199
      %v1232 = vunpack.c.l.b16 %v1200
      %v1233 = vunpack.c.l.b16 %v1201
      %v1234 = vunpack.c.l.b16 %v1202
      %v1235 = vunpack.c.l.b16 %v1203
      %v1236 = vunpack.c.l.b16 %v1204
      %v1237 = vunpack.c.l.b16 %v1205
      %v1238 = vunpack.c.l.b16 %v1206
      %v1239 = vunpack.c.l.b16 %v1207
      %v1240 = vunpack.c.l.b16 %v1208
      %v1241 = vunpack.c.l.b16 %v1209
      %v1242 = vunpack.c.l.b16 %v1210
      %v1243 = vunpack.c.l.b16 %v1211
      %v1244 = vunpack.c.l.b16 %v1212
      %v1245 = vunpack.c.l.b16 %v1213
      %v1246 = vpack.c.b16 %v1231, %v1230
      %v1247 = vpack.c.b16 %v1233, %v1232
      %v1248 = vpack.c.b16 %v1235, %v1234
      %v1249 = vpack.c.b16 %v1237, %v1236
      %v1250 = vpack.c.b16 %v1239, %v1238
      %v1251 = vpack.c.b16 %v1241, %v1240
      %v1252 = vpack.c.b16 %v1243, %v1242
      %v1253 = vpack.c.b16 %v1245, %v1244
      %1262 = vmatpush.bf16.msra.mxu0 %v1253
      %1263 = vmatpush.bf16.msra.mxu0 %v1252
      %1264 = vmatpush.bf16.msra.mxu0 %v1251
      %1265 = vmatpush.bf16.msra.mxu0 %v1250
      %1266 = vmatpush.bf16.msra.mxu0 %v1249
      %1267 = vmatpush.bf16.msra.mxu0 %v1248
      %1268 = vmatpush.bf16.msra.mxu0 %v1247
      %1269 = vmatpush.bf16.msra.mxu0 %v1246
      %1270 = vmatmul.bf16.gmra.mxu0 %v1197
      %v1271 = vpop.f32.mrf.mxu0
      %v1272 = vadd.f32 0.0, %v1271
      %v1273 = vpop.f32.mrf.mxu0
      %1274 = vdwg.mxu0
      %v1275 = vadd.f32 %v1195, %v1272
      %v1276 = vmul.f32 %v1275, 0.5
      %v1277 = vtanh.pop %v1276
      %v1278 = vmul.f32 %v1277, 0.5
      %v1279 = vadd.f32 %v1278, 0.5
      %v1280 = vld [vmem:[%s1 + $0x4] sm:$0xf]
      %v1281 = vld [vmem:[%s1 + $0x14] sm:$0xf]
      %v1282 = vld [vmem:[%s1 + $0x24] sm:$0xf]
      %v1283 = vld [vmem:[%s1 + $0x34] sm:$0xf]
      %v1284 = vld [vmem:[%s1 + $0x44] sm:$0xf]
      %v1285 = vld [vmem:[%s1 + $0x54] sm:$0xf]
      %v1286 = vld [vmem:[%s1 + $0x64] sm:$0xf]
      %v1287 = vld [vmem:[%s1 + $0x74] sm:$0xf]
      %v1288 = vld [vmem:[%s1 + $0x84] sm:$0xf]
      %v1289 = vld [vmem:[%s1 + $0x94] sm:$0xf]
      %v1290 = vld [vmem:[%s1 + $0xa4] sm:$0xf]
      %v1291 = vld [vmem:[%s1 + $0xb4] sm:$0xf]
      %v1292 = vld [vmem:[%s1 + $0xc4] sm:$0xf]
      %v1293 = vld [vmem:[%s1 + $0xd4] sm:$0xf]
      %v1294 = vld [vmem:[%s1 + $0xe4] sm:$0xf]
      %v1295 = vld [vmem:[%s1 + $0xf4] sm:$0xf]
      %v1312 = vunpack.c.l.b16 %v1280
      %v1313 = vunpack.c.l.b16 %v1281
      %v1314 = vunpack.c.l.b16 %v1282
      %v1315 = vunpack.c.l.b16 %v1283
      %v1316 = vunpack.c.l.b16 %v1284
      %v1317 = vunpack.c.l.b16 %v1285
      %v1318 = vunpack.c.l.b16 %v1286
      %v1319 = vunpack.c.l.b16 %v1287
      %v1320 = vunpack.c.l.b16 %v1288
      %v1321 = vunpack.c.l.b16 %v1289
      %v1322 = vunpack.c.l.b16 %v1290
      %v1323 = vunpack.c.l.b16 %v1291
      %v1324 = vunpack.c.l.b16 %v1292
      %v1325 = vunpack.c.l.b16 %v1293
      %v1326 = vunpack.c.l.b16 %v1294
      %v1327 = vunpack.c.l.b16 %v1295
      %v1328 = vpack.c.b16 %v1313, %v1312
      %v1329 = vpack.c.b16 %v1315, %v1314
      %v1330 = vpack.c.b16 %v1317, %v1316
      %v1331 = vpack.c.b16 %v1319, %v1318
      %v1332 = vpack.c.b16 %v1321, %v1320
      %v1333 = vpack.c.b16 %v1323, %v1322
      %v1334 = vpack.c.b16 %v1325, %v1324
      %v1335 = vpack.c.b16 %v1327, %v1326
      %1344 = vmatpush.bf16.msra.mxu0 %v1335
      %1345 = vmatpush.bf16.msra.mxu0 %v1334
      %1346 = vmatpush.bf16.msra.mxu0 %v1333
      %1347 = vmatpush.bf16.msra.mxu0 %v1332
      %1348 = vmatpush.bf16.msra.mxu0 %v1331
      %1349 = vmatpush.bf16.msra.mxu0 %v1330
      %1350 = vmatpush.bf16.msra.mxu0 %v1329
      %1351 = vmatpush.bf16.msra.mxu0 %v1328
      %1352 = vmatmul.bf16.gmra.mxu0 %v1197
      %v1353 = vpop.f32.mrf.mxu0
      %v1354 = vadd.f32 0.0, %v1353
      %v1355 = vpop.f32.mrf.mxu0
      %1356 = vdwg.mxu0
      %v1358 = vrot.slane %v1195, 2
      %v1360 = vadd.f32 %v1358, %v1354
      %v1361 = vmul.f32 %v1360, 0.5
      %v1362 = vtanh.pop %v1361
      %v1363 = vmul.f32 %v1362, 0.5
      %v1364 = vadd.f32 %v1363, 0.5
      %v1365 = vld [vmem:[%s1 + $0x8] sm:$0xf]
      %v1366 = vld [vmem:[%s1 + $0x18] sm:$0xf]
      %v1367 = vld [vmem:[%s1 + $0x28] sm:$0xf]
      %v1368 = vld [vmem:[%s1 + $0x38] sm:$0xf]
      %v1369 = vld [vmem:[%s1 + $0x48] sm:$0xf]
      %v1370 = vld [vmem:[%s1 + $0x58] sm:$0xf]
      %v1371 = vld [vmem:[%s1 + $0x68] sm:$0xf]
      %v1372 = vld [vmem:[%s1 + $0x78] sm:$0xf]
      %v1373 = vld [vmem:[%s1 + $0x88] sm:$0xf]
      %v1374 = vld [vmem:[%s1 + $0x98] sm:$0xf]
      %v1375 = vld [vmem:[%s1 + $0xa8] sm:$0xf]
      %v1376 = vld [vmem:[%s1 + $0xb8] sm:$0xf]
      %v1377 = vld [vmem:[%s1 + $0xc8] sm:$0xf]
      %v1378 = vld [vmem:[%s1 + $0xd8] sm:$0xf]
      %v1379 = vld [vmem:[%s1 + $0xe8] sm:$0xf]
      %v1380 = vld [vmem:[%s1 + $0xf8] sm:$0xf]
      %v1397 = vunpack.c.l.b16 %v1365
      %v1398 = vunpack.c.l.b16 %v1366
      %v1399 = vunpack.c.l.b16 %v1367
      %v1400 = vunpack.c.l.b16 %v1368
      %v1401 = vunpack.c.l.b16 %v1369
      %v1402 = vunpack.c.l.b16 %v1370
      %v1403 = vunpack.c.l.b16 %v1371
      %v1404 = vunpack.c.l.b16 %v1372
      %v1405 = vunpack.c.l.b16 %v1373
      %v1406 = vunpack.c.l.b16 %v1374
      %v1407 = vunpack.c.l.b16 %v1375
      %v1408 = vunpack.c.l.b16 %v1376
      %v1409 = vunpack.c.l.b16 %v1377
      %v1410 = vunpack.c.l.b16 %v1378
      %v1411 = vunpack.c.l.b16 %v1379
      %v1412 = vunpack.c.l.b16 %v1380
      %v1413 = vpack.c.b16 %v1398, %v1397
      %v1414 = vpack.c.b16 %v1400, %v1399
      %v1415 = vpack.c.b16 %v1402, %v1401
      %v1416 = vpack.c.b16 %v1404, %v1403
      %v1417 = vpack.c.b16 %v1406, %v1405
      %v1418 = vpack.c.b16 %v1408, %v1407
      %v1419 = vpack.c.b16 %v1410, %v1409
      %v1420 = vpack.c.b16 %v1412, %v1411
      %1429 = vmatpush.bf16.msra.mxu0 %v1420
      %1430 = vmatpush.bf16.msra.mxu0 %v1419
      %1431 = vmatpush.bf16.msra.mxu0 %v1418
      %1432 = vmatpush.bf16.msra.mxu0 %v1417
      %1433 = vmatpush.bf16.msra.mxu0 %v1416
      %1434 = vmatpush.bf16.msra.mxu0 %v1415
      %1435 = vmatpush.bf16.msra.mxu0 %v1414
      %1436 = vmatpush.bf16.msra.mxu0 %v1413
      %1437 = vmatmul.bf16.gmra.mxu0 %v1197
      %v1438 = vpop.f32.mrf.mxu0
      %v1439 = vadd.f32 0.0, %v1438
      %v1440 = vpop.f32.mrf.mxu0
      %1441 = vdwg.mxu0
      %v1442 = vrot.slane %v1195, 4
      %v1444 = vadd.f32 %v1442, %v1439
      %v1445 = vtanh.pop %v1444
      %v1446 = vld [vmem:[#allocation3] sm:$0x3]
      %v1447 = vmul.f32 %v1364, %v1446
      %v1448 = vmul.f32 %v1279, %v1445
      %v1449 = vadd.f32 %v1447, %v1448
      %v1450 = vld [vmem:[%s1 + $0xc] sm:$0xf]
      %v1451 = vld [vmem:[%s1 + $0x1c] sm:$0xf]
      %v1452 = vld [vmem:[%s1 + $0x2c] sm:$0xf]
      %v1453 = vld [vmem:[%s1 + $0x3c] sm:$0xf]
      %v1454 = vld [vmem:[%s1 + $0x4c] sm:$0xf]
      %v1455 = vld [vmem:[%s1 + $0x5c] sm:$0xf]
      %v1456 = vld [vmem:[%s1 + $0x6c] sm:$0xf]
      %v1457 = vld [vmem:[%s1 + $0x7c] sm:$0xf]
      %v1458 = vld [vmem:[%s1 + $0x8c] sm:$0xf]
      %v1459 = vld [vmem:[%s1 + $0x9c] sm:$0xf]
      %v1460 = vld [vmem:[%s1 + $0xac] sm:$0xf]
      %v1461 = vld [vmem:[%s1 + $0xbc] sm:$0xf]
      %v1462 = vld [vmem:[%s1 + $0xcc] sm:$0xf]
      %v1463 = vld [vmem:[%s1 + $0xdc] sm:$0xf]
      %v1464 = vld [vmem:[%s1 + $0xec] sm:$0xf]
      %v1465 = vld [vmem:[%s1 + $0xfc] sm:$0xf]
      %v1482 = vunpack.c.l.b16 %v1450
      %v1483 = vunpack.c.l.b16 %v1451
      %v1484 = vunpack.c.l.b16 %v1452
      %v1485 = vunpack.c.l.b16 %v1453
      %v1486 = vunpack.c.l.b16 %v1454
      %v1487 = vunpack.c.l.b16 %v1455
      %v1488 = vunpack.c.l.b16 %v1456
      %v1489 = vunpack.c.l.b16 %v1457
      %v1490 = vunpack.c.l.b16 %v1458
      %v1491 = vunpack.c.l.b16 %v1459
      %v1492 = vunpack.c.l.b16 %v1460
      %v1493 = vunpack.c.l.b16 %v1461
      %v1494 = vunpack.c.l.b16 %v1462
      %v1495 = vunpack.c.l.b16 %v1463
      %v1496 = vunpack.c.l.b16 %v1464
      %v1497 = vunpack.c.l.b16 %v1465
      %v1498 = vpack.c.b16 %v1483, %v1482
      %v1499 = vpack.c.b16 %v1485, %v1484
      %v1500 = vpack.c.b16 %v1487, %v1486
      %v1501 = vpack.c.b16 %v1489, %v1488
      %v1502 = vpack.c.b16 %v1491, %v1490
      %v1503 = vpack.c.b16 %v1493, %v1492
      %v1504 = vpack.c.b16 %v1495, %v1494
      %v1505 = vpack.c.b16 %v1497, %v1496
      %1514 = vmatpush.bf16.msra.mxu0 %v1505
      %1515 = vmatpush.bf16.msra.mxu0 %v1504
      %1516 = vmatpush.bf16.msra.mxu0 %v1503
      %1517 = vmatpush.bf16.msra.mxu0 %v1502
      %1518 = vmatpush.bf16.msra.mxu0 %v1501
      %1519 = vmatpush.bf16.msra.mxu0 %v1500
      %1520 = vmatpush.bf16.msra.mxu0 %v1499
      %1521 = vmatpush.bf16.msra.mxu0 %v1498
      %1522 = vmatmul.bf16.gmra.mxu0 %v1197
      %v1523 = vpop.f32.mrf.mxu0
      %v1524 = vadd.f32 0.0, %v1523
      %v1525 = vpop.f32.mrf.mxu0
      %1526 = vdwg.mxu0
      %v1527 = vrot.slane %v1195, 6
      %v1529 = vadd.f32 %v1527, %v1524
      %v1530 = vmul.f32 %v1529, 0.5
      %v1531 = vtanh.pop %v1530
      %v1532 = vmul.f32 %v1531, 0.5
      %v1533 = vadd.f32 %v1532, 0.5
      %v1534 = vtanh.pop %v1449
      %v1535 = vmul.f32 %v1533, %v1534
      %1536 = vst [vmem:[#allocation3] sm:$0x3] %v1449
      %1537 = vst [vmem:[#allocation2] sm:$0x3] %v1535
      %v1538 = vpack.c.bf16 %v1535, %v1535
      %s1539 = scalar_lea.vmem %s143, 3
      %1540 = vst [vmem:[%s1539] sm:$0x1] %v1538
      %s1541 = smul.u32 4, %s13
      %p1542 = scmp.lt.s32.totalorder %s1541, 7
      %s1543 = scalar_select %p1542, %s1541, 7
      %s1544 = scalar_lea.vmem %s2, %s1543
      // Predicated region
      $region33: #{client_lstm_forward.1} parent=27 // pred_check
        %p1545 = pneg %p78
      $region34: #{client_lstm_forward.1} parent=27 // pred_check_branch
        %1547 = sbr.rel (%p1545) target = $region36
      $region35: #{client_lstm_forward.1} parent=27 // pred_region
        %s1548 = smul.u32 4, %s13
      $region36: #{client_lstm_forward.1} parent=27 // pred_fallthru
        _
    $region28: #{client_lstm_forward.1} parent=5 // pred_fallthru
      _
    %p1549 = scmp.le.s32.totalorder 2, %s8
    // Predicated region
    $region37: #{client_lstm_forward.1} parent=5 // pred_check
      %p1550 = pneg %p1549
    $region38: #{client_lstm_forward.1} parent=5 // pred_check_branch
      %1552 = sbr.rel (%p1550) target = $region40
    $region39: #{client_lstm_forward.1} parent=5 // pred_region
      %s1553 = ssub.s32 %s8, 2
      // Predicated region
      $region41: #{client_lstm_forward.1} parent=39 // pred_check
        %p1554 = pneg %p84
      $region42: #{client_lstm_forward.1} parent=39 // pred_check_branch
        %1556 = sbr.rel (%p1554) target = $region44
      $region43: #{client_lstm_forward.1} parent=39 // pred_region
        %s1557 = smul.u32 4, %s14
        %p1558 = scmp.lt.s32.totalorder %s1557, 7
        %s1559 = scalar_select %p1558, %s1557, 7
        %s1560 = scalar_lea.vmem %s2, %s1559
      $region44: #{client_lstm_forward.1} parent=39 // pred_fallthru
        _
    $region40: #{client_lstm_forward.1} parent=5 // pred_fallthru
      _
  $region6: #{client_lstm_forward.1} parent=0 // loop_footer
    %s12 = sadd.s32 1, %s8
  $region7: #{client_lstm_forward.1} parent=0 // loop_footer_branch
    %7 = sbr.rel target = $region3
  $region8: #{client_lstm_forward.1} parent=0 // loop_exit
    _

</llo_original>
